<compile_context>
chip_gen: v7x
topology: tpu7x:2x2x1
jax: 0.10.0
libtpu: 0.0.40
codegen_flags: <defaults>
</compile_context>

<pallas_src>
import jax
import jax.numpy as jnp
from jax.experimental import pallas as pl
from jax.experimental.pallas import tpu as pltpu

FEAT = 864                 # flattened feature size (contraction dim, unpadded)
HID = 256                  # classifier hidden size
NCLS = 60                  # number of classes
NDOM = 6                   # number of domains
PAD = 128                  # lane padding for the small output dims
FUSED_OUT = HID + PAD      # 384: [classifier hidden | padded domain logits]
BN_EPS = 1e-5


def _dann_head_kernel(x_ref, wf_ref, bd_ref, gamma_ref, beta_ref,
                      w2_ref, b2_ref, out_ref):
    # Cast activations to bf16 in-kernel (no wrapper pad/cast, single x DMA).
    x_bf = x_ref[...].astype(jnp.bfloat16)                    # (B, 864) bf16

    # One fused MXU pass over [w1 | wd]; K=864 partial tile handled by Mosaic.
    hz = jnp.dot(x_bf, wf_ref[...],
                 preferred_element_type=jnp.float32)          # (B, 384) f32

    h = hz[:, :HID]                                           # classifier pre-BN
    dom = hz[:, HID:FUSED_OUT] + bd_ref[...]                  # domain logits (padded)

    # BatchNorm1d(256), training-mode (batch stats, biased variance).
    # Linear bias b1 is cancelled exactly by the mean subtraction -> not an input.
    mean = jnp.mean(h, axis=0, keepdims=True)                 # (1, 256)
    c = h - mean
    var = jnp.mean(c * c, axis=0, keepdims=True)
    scale = gamma_ref[...] * jax.lax.rsqrt(var + BN_EPS)      # fused BN affine
    h = c * scale + beta_ref[...]

    # ReLU
    h = jnp.maximum(h, 0.0)

    # Linear(256 -> 60), output padded to 128 lanes; bf16 weight, f32 accum.
    cls = jnp.dot(h.astype(jnp.bfloat16), w2_ref[...],
                  preferred_element_type=jnp.float32) + b2_ref[...]

    # Single lane-dense output slab: [class_pad | domain_pad], aligned stores.
    out_ref[:, 0:PAD] = cls
    out_ref[:, PAD:2 * PAD] = dom


@jax.jit
def dann_head(x, w_fused, bd_pad, gamma, beta, w2_pad, b2_pad):
    """x: (B, 864) f32 features -> (class_out (B,60), domain_out (B,6)) f32."""
    B = x.shape[0]
    out = pl.pallas_call(
        _dann_head_kernel,
        out_shape=jax.ShapeDtypeStruct((B, 2 * PAD), jnp.float32),
        grid_spec=pltpu.PrefetchScalarGridSpec(
            num_scalar_prefetch=0,
            grid=(1,),
            in_specs=[
                pl.BlockSpec((B, FEAT), lambda i: (0, 0)),            # x (f32, cast in kernel)
                pl.BlockSpec((FEAT, FUSED_OUT), lambda i: (0, 0)),    # [w1|wd] (bf16)
                pl.BlockSpec((1, PAD), lambda i: (0, 0)),             # bd (padded, f32)
                pl.BlockSpec((1, HID), lambda i: (0, 0)),             # gamma
                pl.BlockSpec((1, HID), lambda i: (0, 0)),             # beta
                pl.BlockSpec((HID, PAD), lambda i: (0, 0)),           # w2 (padded, bf16)
                pl.BlockSpec((1, PAD), lambda i: (0, 0)),             # b2 (padded, f32)
            ],
            out_specs=pl.BlockSpec((B, 2 * PAD), lambda i: (0, 0)),
        ),
        compiler_params=pltpu.CompilerParams(
            dimension_semantics=("arbitrary",)),
    )(x, w_fused, bd_pad, gamma, beta, w2_pad, b2_pad)

    # Public interface matches the PyTorch module: two tensors.
    return out[:, :NCLS], out[:, PAD:PAD + NDOM]


def init_params(key):
    """nn.Linear-style init.  Returns (raw PyTorch-layout params, packed kernel params)."""
    k1, k2, k3, k4, k5, k6 = jax.random.split(key, 6)

    def lin(kw, kb, fan_in, fan_out):
        bound = 1.0 / (fan_in ** 0.5)
        w = jax.random.uniform(kw, (fan_in, fan_out), jnp.float32, -bound, bound)
        b = jax.random.uniform(kb, (fan_out,), jnp.float32, -bound, bound)
        return w, b

    w1, b1 = lin(k1, k2, FEAT, HID)          # classifier Linear(864, 256)
    w2, b2 = lin(k3, k4, HID, NCLS)          # classifier Linear(256, 60)
    wd, bd = lin(k5, k6, FEAT, NDOM)         # domain Linear(864, 6)
    gamma = jnp.ones((HID,), jnp.float32)    # BatchNorm1d weight
    beta = jnp.zeros((HID,), jnp.float32)    # BatchNorm1d bias

    # --- pack for the kernel ---
    # Fused first-layer weight: lanes [0:256]=w1, [256:262]=wd, rest zero. bf16.
    w_fused = jnp.zeros((FEAT, FUSED_OUT), jnp.float32)
    w_fused = w_fused.at[:, :HID].set(w1)
    w_fused = w_fused.at[:, HID:HID + NDOM].set(wd)
    w_fused = w_fused.astype(jnp.bfloat16)

    bd_pad = jnp.zeros((1, PAD), jnp.float32).at[0, :NDOM].set(bd)
    w2_pad = jnp.zeros((HID, PAD), jnp.float32).at[:, :NCLS].set(w2).astype(jnp.bfloat16)
    b2_pad = jnp.zeros((1, PAD), jnp.float32).at[0, :NCLS].set(b2)

    raw = (w1, b1, gamma, beta, w2, b2, wd, bd)
    packed = (w_fused, bd_pad,
              jnp.reshape(gamma, (1, HID)), jnp.reshape(beta, (1, HID)),
              w2_pad, b2_pad)
    return raw, packed


def reference_packed(x, w_fused, bd_pad, gamma, beta, w2_pad, b2_pad):
    """Pure-JAX reference replicating the kernel's exact bf16 quantization."""
    xq = x.astype(jnp.bfloat16).astype(jnp.float32)
    wf = w_fused.astype(jnp.float32)
    hz = xq @ wf
    h = hz[:, :HID]
    dom = hz[:, HID:] + bd_pad
    mean = jnp.mean(h, axis=0, keepdims=True)
    var = jnp.mean((h - mean) ** 2, axis=0, keepdims=True)
    h = (h - mean) * (gamma * jax.lax.rsqrt(var + BN_EPS)) + beta
    h = jnp.maximum(h, 0.0)
    hq = h.astype(jnp.bfloat16).astype(jnp.float32)
    cls = hq @ w2_pad.astype(jnp.float32) + b2_pad
    return cls[:, :NCLS], dom[:, :NDOM]


def reference_torch_like(x, w1, b1, gamma, beta, w2, b2, wd, bd):
    """Full f32 reference with PyTorch-module semantics (keeps b1)."""
    h = x @ w1 + b1
    mean = jnp.mean(h, axis=0, keepdims=True)
    var = jnp.mean((h - mean) ** 2, axis=0, keepdims=True)
    h = (h - mean) / jnp.sqrt(var + BN_EPS) * gamma + beta
    h = jnp.maximum(h, 0.0)
    class_out = h @ w2 + b2
    domain_out = x @ wd + bd          # gradient reversal is identity in forward
    return class_out, domain_out


if __name__ == "__main__":
    key = jax.random.PRNGKey(0)
    kx, kp = jax.random.split(key)

    B = 8
    # x is the flattened pyramidnet272 feature, shape (B, 864)
    x = jax.random.normal(kx, (B, FEAT), jnp.float32)
    raw, packed = init_params(kp)

    class_out, domain_out = dann_head(x, *packed)
    jax.block_until_ready((class_out, domain_out))

    assert class_out.shape == (B, NCLS) and domain_out.shape == (B, NDOM)

    # Tight check: reference with identical bf16 quantization.
    ref_c, ref_d = reference_packed(x, *packed)
    assert jnp.allclose(class_out, ref_c, atol=2e-3, rtol=2e-3)
    assert jnp.allclose(domain_out, ref_d, atol=2e-3, rtol=2e-3)

    # Loose check vs full-f32 PyTorch semantics (includes b1 -> verifies the
    # b1-cancellation and matmul fusion are exact up to bf16 quantization).
    tref_c, tref_d = reference_torch_like(x, *raw)
    assert jnp.allclose(class_out, tref_c, atol=5e-2, rtol=5e-2)
    assert jnp.allclose(domain_out, tref_d, atol=5e-2, rtol=5e-2)

    print("KERNEL_OK")
</pallas_src>

<mosaic_0001>
module attributes {stable_mosaic.version = 11 : i64} {
  func.func @_dann_head_kernel(%arg0: i32, %arg1: memref<8x864xf32, #tpu.memory_space<vmem>>, %arg2: memref<864x384xbf16, #tpu.memory_space<vmem>>, %arg3: memref<1x128xf32, #tpu.memory_space<vmem>>, %arg4: memref<1x256xf32, #tpu.memory_space<vmem>>, %arg5: memref<1x256xf32, #tpu.memory_space<vmem>>, %arg6: memref<256x128xbf16, #tpu.memory_space<vmem>>, %arg7: memref<1x128xf32, #tpu.memory_space<vmem>>, %arg8: memref<8x256xf32, #tpu.memory_space<vmem>>) attributes {dimension_semantics = [#tpu.dimension_semantics<arbitrary>], iteration_bounds = array<i64: 1>, scalar_prefetch = 0 : i64, scratch_operands = 0 : i64, tpu.core_type = #tpu.core_type<tc>, window_params = [{pipeline_mode = #tpu.pipeline_mode<synchronous>, transform_indices = @transform_0, window_bounds = array<i64: 8, 864>}, {pipeline_mode = #tpu.pipeline_mode<synchronous>, transform_indices = @transform_1, window_bounds = array<i64: 864, 384>}, {pipeline_mode = #tpu.pipeline_mode<synchronous>, transform_indices = @transform_2, window_bounds = array<i64: 1, 128>}, {pipeline_mode = #tpu.pipeline_mode<synchronous>, transform_indices = @transform_3, window_bounds = array<i64: 1, 256>}, {pipeline_mode = #tpu.pipeline_mode<synchronous>, transform_indices = @transform_4, window_bounds = array<i64: 1, 256>}, {pipeline_mode = #tpu.pipeline_mode<synchronous>, transform_indices = @transform_5, window_bounds = array<i64: 256, 128>}, {pipeline_mode = #tpu.pipeline_mode<synchronous>, transform_indices = @transform_6, window_bounds = array<i64: 1, 128>}, {pipeline_mode = #tpu.pipeline_mode<synchronous>, transform_indices = @transform_7, window_bounds = array<i64: 8, 256>}]} {
    %c0 = arith.constant 0 : index
    %c0_0 = arith.constant 0 : index
    %0 = vector.load %arg1[%c0, %c0_0] : memref<8x864xf32, #tpu.memory_space<vmem>>, vector<8x864xf32>
    %1 = arith.truncf %0 : vector<8x864xf32> to vector<8x864xbf16>
    %c0_1 = arith.constant 0 : index
    %c0_2 = arith.constant 0 : index
    %2 = vector.load %arg2[%c0_1, %c0_2] : memref<864x384xbf16, #tpu.memory_space<vmem>>, vector<864x384xbf16>
    %cst = arith.constant dense<0.000000e+00> : vector<8x384xf32>
    %3 = tpu.matmul %1, %2, %cst {dimension_numbers = #tpu.dot_dimension_numbers<[1], [0], [0], [1], [0, 0, 1, 1], [], []>} : vector<8x864xbf16>, vector<864x384xbf16>, vector<8x384xf32> -> vector<8x384xf32>
    %4 = vector.extract_strided_slice %3 {offsets = [0, 0], sizes = [8, 256], strides = [1, 1]} : vector<8x384xf32> to vector<8x256xf32>
    %5 = vector.extract_strided_slice %3 {offsets = [0, 256], sizes = [8, 128], strides = [1, 1]} : vector<8x384xf32> to vector<8x128xf32>
    %c0_3 = arith.constant 0 : index
    %c0_4 = arith.constant 0 : index
    %6 = vector.load %arg3[%c0_3, %c0_4] : memref<1x128xf32, #tpu.memory_space<vmem>>, vector<1x128xf32>
    %7 = vector.broadcast %6 : vector<1x128xf32> to vector<8x128xf32>
    %8 = arith.addf %5, %7 : vector<8x128xf32>
    %cst_5 = arith.constant dense<0.000000e+00> : vector<256xf32>
    %9 = vector.multi_reduction <add>, %4, %cst_5 [0] : vector<8x256xf32> to vector<256xf32>
    %10 = vector.shape_cast %9 : vector<256xf32> to vector<1x256xf32>
    %cst_6 = arith.constant 8.000000e+00 : f32
    %11 = vector.broadcast %cst_6 : f32 to vector<1x256xf32>
    %12 = arith.divf %10, %11 : vector<1x256xf32>
    %13 = vector.broadcast %12 : vector<1x256xf32> to vector<8x256xf32>
    %14 = arith.subf %4, %13 : vector<8x256xf32>
    %15 = arith.mulf %14, %14 : vector<8x256xf32>
    %cst_7 = arith.constant dense<0.000000e+00> : vector<256xf32>
    %16 = vector.multi_reduction <add>, %15, %cst_7 [0] : vector<8x256xf32> to vector<256xf32>
    %17 = vector.shape_cast %16 : vector<256xf32> to vector<1x256xf32>
    %cst_8 = arith.constant 8.000000e+00 : f32
    %18 = vector.broadcast %cst_8 : f32 to vector<1x256xf32>
    %19 = arith.divf %17, %18 : vector<1x256xf32>
    %c0_9 = arith.constant 0 : index
    %c0_10 = arith.constant 0 : index
    %20 = vector.load %arg4[%c0_9, %c0_10] : memref<1x256xf32, #tpu.memory_space<vmem>>, vector<1x256xf32>
    %cst_11 = arith.constant 9.99999974E-6 : f32
    %21 = vector.broadcast %cst_11 : f32 to vector<1x256xf32>
    %22 = arith.addf %19, %21 : vector<1x256xf32>
    %23 = math.rsqrt %22 : vector<1x256xf32>
    %24 = arith.mulf %20, %23 : vector<1x256xf32>
    %25 = vector.broadcast %24 : vector<1x256xf32> to vector<8x256xf32>
    %26 = arith.mulf %14, %25 : vector<8x256xf32>
    %c0_12 = arith.constant 0 : index
    %c0_13 = arith.constant 0 : index
    %27 = vector.load %arg5[%c0_12, %c0_13] : memref<1x256xf32, #tpu.memory_space<vmem>>, vector<1x256xf32>
    %28 = vector.broadcast %27 : vector<1x256xf32> to vector<8x256xf32>
    %29 = arith.addf %26, %28 : vector<8x256xf32>
    %cst_14 = arith.constant 0.000000e+00 : f32
    %30 = vector.broadcast %cst_14 : f32 to vector<8x256xf32>
    %31 = arith.maximumf %29, %30 : vector<8x256xf32>
    %32 = arith.truncf %31 : vector<8x256xf32> to vector<8x256xbf16>
    %c0_15 = arith.constant 0 : index
    %c0_16 = arith.constant 0 : index
    %33 = vector.load %arg6[%c0_15, %c0_16] : memref<256x128xbf16, #tpu.memory_space<vmem>>, vector<256x128xbf16>
    %cst_17 = arith.constant dense<0.000000e+00> : vector<8x128xf32>
    %34 = tpu.matmul %32, %33, %cst_17 {dimension_numbers = #tpu.dot_dimension_numbers<[1], [0], [0], [1], [0, 0, 1, 1], [], []>} : vector<8x256xbf16>, vector<256x128xbf16>, vector<8x128xf32> -> vector<8x128xf32>
    %c0_18 = arith.constant 0 : index
    %c0_19 = arith.constant 0 : index
    %35 = vector.load %arg7[%c0_18, %c0_19] : memref<1x128xf32, #tpu.memory_space<vmem>>, vector<1x128xf32>
    %36 = vector.broadcast %35 : vector<1x128xf32> to vector<8x128xf32>
    %37 = arith.addf %34, %36 : vector<8x128xf32>
    %c0_20 = arith.constant 0 : index
    %c0_21 = arith.constant 0 : index
    %38 = vector.load %arg8[%c0_20, %c0_21] : memref<8x256xf32, #tpu.memory_space<vmem>>, vector<8x128xf32>
    tpu.vector_store %arg8[%c0_20, %c0_21], %37 {strides = array<i32>} : memref<8x256xf32, #tpu.memory_space<vmem>>, vector<8x128xf32>,
    %c0_22 = arith.constant 0 : index
    %c128 = arith.constant 128 : index
    %39 = vector.load %arg8[%c0_22, %c128] : memref<8x256xf32, #tpu.memory_space<vmem>>, vector<8x128xf32>
    tpu.vector_store %arg8[%c0_22, %c128], %8 {strides = array<i32>} : memref<8x256xf32, #tpu.memory_space<vmem>>, vector<8x128xf32>,
    return
  }
  func.func @transform_0(%arg0: i32) -> (i32, i32) {
    %c0_i32 = arith.constant 0 : i32
    %c0_i32_0 = arith.constant 0 : i32
    %c0_i32_1 = arith.constant 0 : i32
    return %c0_i32, %c0_i32_0 : i32, i32
  }
  func.func @transform_1(%arg0: i32) -> (i32, i32) {
    %c0_i32 = arith.constant 0 : i32
    %c0_i32_0 = arith.constant 0 : i32
    %c0_i32_1 = arith.constant 0 : i32
    return %c0_i32, %c0_i32_0 : i32, i32
  }
  func.func @transform_2(%arg0: i32) -> (i32, i32) {
    %c0_i32 = arith.constant 0 : i32
    %c0_i32_0 = arith.constant 0 : i32
    %c0_i32_1 = arith.constant 0 : i32
    return %c0_i32, %c0_i32_0 : i32, i32
  }
  func.func @transform_3(%arg0: i32) -> (i32, i32) {
    %c0_i32 = arith.constant 0 : i32
    %c0_i32_0 = arith.constant 0 : i32
    %c0_i32_1 = arith.constant 0 : i32
    return %c0_i32, %c0_i32_0 : i32, i32
  }
  func.func @transform_4(%arg0: i32) -> (i32, i32) {
    %c0_i32 = arith.constant 0 : i32
    %c0_i32_0 = arith.constant 0 : i32
    %c0_i32_1 = arith.constant 0 : i32
    return %c0_i32, %c0_i32_0 : i32, i32
  }
  func.func @transform_5(%arg0: i32) -> (i32, i32) {
    %c0_i32 = arith.constant 0 : i32
    %c0_i32_0 = arith.constant 0 : i32
    %c0_i32_1 = arith.constant 0 : i32
    return %c0_i32, %c0_i32_0 : i32, i32
  }
  func.func @transform_6(%arg0: i32) -> (i32, i32) {
    %c0_i32 = arith.constant 0 : i32
    %c0_i32_0 = arith.constant 0 : i32
    %c0_i32_1 = arith.constant 0 : i32
    return %c0_i32, %c0_i32_0 : i32, i32
  }
  func.func @transform_7(%arg0: i32) -> (i32, i32) {
    %c0_i32 = arith.constant 0 : i32
    %c0_i32_0 = arith.constant 0 : i32
    %c0_i32_1 = arith.constant 0 : i32
    return %c0_i32, %c0_i32_0 : i32, i32
  }
}

</mosaic_0001>

<llo_original>
// kernel: dann_head.1
$region0: #{dann_head.1}
  #allocation0 [shape = 'u32[]', space=smem, size = 0x4, offset = 0x4, fixed_abs, tag = 'smem constant byte address 0x4 - core index']
  #allocation1 [shape = 'u32[144,128]{1,0:T(1,128)}', space=vmem, size = 0x12000, scoped, tag = 'internal scratch']
  %s0 = inlined_call_operand.hbm [shape: f32[8,864], index: 0, kind: input, shape index: {}]
  %s1 = inlined_call_operand.hbm [shape: bf16[864,384], index: 1, kind: input, shape index: {}]
  %s2 = inlined_call_operand.vmem [shape: f32[1,128], index: 2, kind: input, shape index: {}]
  %s3 = inlined_call_operand.vmem [shape: f32[1,256], index: 3, kind: input, shape index: {}]
  %s4 = inlined_call_operand.vmem [shape: f32[1,256], index: 4, kind: input, shape index: {}]
  %s5 = inlined_call_operand.hbm [shape: bf16[256,128], index: 5, kind: input, shape index: {}]
  %s6 = inlined_call_operand.vmem [shape: f32[1,128], index: 6, kind: input, shape index: {}]
  %s7 = inlined_call_operand.vmem [shape: f32[8,256], index: 7, kind: output, shape index: {}]
  %s8 = sld [smem:[#allocation0]]
  $region50: #{dann_head.1} parent=0
    _
  %s10 = ssub.s32 1, %s8
  %s11 = scalar_select 0, %s10, %s8
  $region1: #{dann_head.1} parent=0
    #allocation2 [shape = 'u8[28672]{0}', space=vmem, size = 0x7000, scoped, tag = 'input window, operand 0, single buffered']
    #allocation3 [shape = 's32[1]{0}', space=sflag, size = 0x4, scoped, tag = 'scoped memory for dann_head.1']
    #allocation4 [shape = 'u8[663552]{0}', space=vmem, size = 0xa2000, scoped, tag = 'input window, operand 1, single buffered']
    #allocation5 [shape = 's32[1]{0}', space=sflag, size = 0x4, scoped, tag = 'scoped memory for dann_head.1']
    #allocation6 [shape = 'u8[65536]{0}', space=vmem, size = 0x10000, scoped, tag = 'input window, operand 5, single buffered']
    %12 = vsyncpa [#allocation3], 0
    %13 = vsyncpa [#allocation5], 0
    // Predicated region
    $region2: #{dann_head.1} parent=1 // pred_check
      _
    $region3: #{dann_head.1} parent=1 // pred_check_branch
      %15 = sbr.rel (0) target = $region5
    $region4: #{dann_head.1} parent=1 // pred_region
      %s17 = ssub.s32 896, 896
      %18 = vsyncadd [#allocation3], %s17
      %s20 = sshll.u32 [#allocation2], 4
      %s21 = int_to_ptr.vmem [resolvable:$true] %s20
      %23 = dma.hbm_to_vmem [thread:$0]  %s0, 896, %s21, [#allocation3]
    $region5: #{dann_head.1} parent=1 // pred_fallthru
      _
    // Predicated region
    $region6: #{dann_head.1} parent=1 // pred_check
      _
    $region7: #{dann_head.1} parent=1 // pred_check_branch
      %25 = sbr.rel (0) target = $region9
    $region8: #{dann_head.1} parent=1 // pred_region
      %s27 = ssub.s32 20736, 20736
      %28 = vsyncadd [#allocation5], %s27
      %s29 = sshll.u32 [#allocation4], 4
      %s30 = int_to_ptr.vmem [resolvable:$true] %s29
      %35 = dma.hbm_to_vmem [thread:$0]  %s1, 20736, %s30, [#allocation5], 192, 192, 12
    $region9: #{dann_head.1} parent=1 // pred_fallthru
      _
    // Predicated region
    $region10: #{dann_head.1} parent=1 // pred_check
      _
    $region11: #{dann_head.1} parent=1 // pred_check_branch
      %37 = sbr.rel (0) target = $region13
    $region12: #{dann_head.1} parent=1 // pred_region
      _
    $region13: #{dann_head.1} parent=1 // pred_fallthru
      _
    // Predicated region
    $region14: #{dann_head.1} parent=1 // pred_check
      _
    $region15: #{dann_head.1} parent=1 // pred_check_branch
      %39 = sbr.rel (0) target = $region17
    $region16: #{dann_head.1} parent=1 // pred_region
      _
    $region17: #{dann_head.1} parent=1 // pred_fallthru
      _
    // Predicated region
    $region18: #{dann_head.1} parent=1 // pred_check
      _
    $region19: #{dann_head.1} parent=1 // pred_check_branch
      %41 = sbr.rel (0) target = $region21
    $region20: #{dann_head.1} parent=1 // pred_region
      _
    $region21: #{dann_head.1} parent=1 // pred_fallthru
      _
    // Predicated region
    $region22: #{dann_head.1} parent=1 // pred_check
      _
    $region23: #{dann_head.1} parent=1 // pred_check_branch
      %43 = sbr.rel (0) target = $region25
    $region24: #{dann_head.1} parent=1 // pred_region
      %s45 = ssub.s32 2048, 2048
      %46 = vsyncadd [#allocation5], %s45
      %s47 = sshll.u32 [#allocation6], 4
      %s48 = int_to_ptr.vmem [resolvable:$true] %s47
      %53 = dma.hbm_to_vmem [thread:$0]  %s5, 2048, %s48, [#allocation5], 64, 64, 4
    $region25: #{dann_head.1} parent=1 // pred_fallthru
      _
    // Predicated region
    $region26: #{dann_head.1} parent=1 // pred_check
      _
    $region27: #{dann_head.1} parent=1 // pred_check_branch
      %55 = sbr.rel (0) target = $region29
    $region28: #{dann_head.1} parent=1 // pred_region
      _
    $region29: #{dann_head.1} parent=1 // pred_fallthru
      _
    // Predicated region
    $region30: #{dann_head.1} parent=1 // pred_check
      _
    $region31: #{dann_head.1} parent=1 // pred_check_branch
      %57 = sbr.rel (0) target = $region33
    $region32: #{dann_head.1} parent=1 // pred_region
      %58 = dma.done [#allocation3], 896
    $region33: #{dann_head.1} parent=1 // pred_fallthru
      _
    // Predicated region
    $region34: #{dann_head.1} parent=1 // pred_check
      _
    $region35: #{dann_head.1} parent=1 // pred_check_branch
      %60 = sbr.rel (0) target = $region37
    $region36: #{dann_head.1} parent=1 // pred_region
      %61 = dma.done [#allocation5], 20736
    $region37: #{dann_head.1} parent=1 // pred_fallthru
      _
    // Predicated region
    $region38: #{dann_head.1} parent=1 // pred_check
      _
    $region39: #{dann_head.1} parent=1 // pred_check_branch
      %63 = sbr.rel (0) target = $region41
    $region40: #{dann_head.1} parent=1 // pred_region
      %64 = dma.done [#allocation5], 2048
    $region41: #{dann_head.1} parent=1 // pred_fallthru
      _
    %v66 = vld [vmem:[#allocation2] sm:$0xff]
    %v67 = vld [vmem:[#allocation2 + $0x8] sm:$0xff]
    %v68 = vld [vmem:[#allocation2 + $0x10] sm:$0xff]
    %v69 = vld [vmem:[#allocation2 + $0x18] sm:$0xff]
    %v70 = vld [vmem:[#allocation2 + $0x20] sm:$0xff]
    %v71 = vld [vmem:[#allocation2 + $0x28] sm:$0xff]
    %v72 = vld [vmem:[#allocation2 + $0x30] sm:$0xff]
    %v73 = vpack.c.bf16 %v66, %v66
    %v74 = vpack.c.bf16 %v67, %v67
    %v75 = vpack.c.bf16 %v68, %v68
    %v76 = vpack.c.bf16 %v69, %v69
    %v77 = vpack.c.bf16 %v70, %v70
    %v78 = vpack.c.bf16 %v71, %v71
    %v79 = vpack.c.bf16 %v72, %v72
    %v80 = vld [vmem:[#allocation4] sm:$0xff]
    %v81 = vld [vmem:[#allocation4 + $0x8] sm:$0xf]
    %v82 = vld [vmem:[#allocation4 + $0xc] sm:$0xff]
    %v83 = vld [vmem:[#allocation4 + $0x14] sm:$0xf]
    %v84 = vld [vmem:[#allocation4 + $0x18] sm:$0xff]
    %v85 = vld [vmem:[#allocation4 + $0x20] sm:$0xf]
    %v86 = vld [vmem:[#allocation4 + $0x24] sm:$0xff]
    %v87 = vld [vmem:[#allocation4 + $0x2c] sm:$0xf]
    %v88 = vld [vmem:[#allocation4 + $0x30] sm:$0xff]
    %v89 = vld [vmem:[#allocation4 + $0x38] sm:$0xf]
    %v90 = vld [vmem:[#allocation4 + $0x3c] sm:$0xff]
    %v91 = vld [vmem:[#allocation4 + $0x44] sm:$0xf]
    %v92 = vld [vmem:[#allocation4 + $0x48] sm:$0xff]
    %v93 = vld [vmem:[#allocation4 + $0x50] sm:$0xf]
    %v94 = vld [vmem:[#allocation4 + $0x54] sm:$0xff]
    %v95 = vld [vmem:[#allocation4 + $0x5c] sm:$0xf]
    %v96 = vld [vmem:[#allocation4 + $0x60] sm:$0xff]
    %v97 = vld [vmem:[#allocation4 + $0x68] sm:$0xf]
    %v98 = vld [vmem:[#allocation4 + $0x6c] sm:$0xff]
    %v99 = vld [vmem:[#allocation4 + $0x74] sm:$0xf]
    %v100 = vld [vmem:[#allocation4 + $0x78] sm:$0xff]
    %v101 = vld [vmem:[#allocation4 + $0x80] sm:$0xf]
    %v102 = vld [vmem:[#allocation4 + $0x84] sm:$0xff]
    %v103 = vld [vmem:[#allocation4 + $0x8c] sm:$0xf]
    %v104 = vld [vmem:[#allocation4 + $0x90] sm:$0xff]
    %v105 = vld [vmem:[#allocation4 + $0x98] sm:$0xf]
    %v106 = vld [vmem:[#allocation4 + $0x9c] sm:$0xff]
    %v107 = vld [vmem:[#allocation4 + $0xa4] sm:$0xf]
    %v108 = vld [vmem:[#allocation4 + $0xa8] sm:$0xff]
    %v109 = vld [vmem:[#allocation4 + $0xb0] sm:$0xf]
    %v110 = vld [vmem:[#allocation4 + $0xb4] sm:$0xff]
    %v111 = vld [vmem:[#allocation4 + $0xbc] sm:$0xf]
    %v112 = vld [vmem:[#allocation4 + $0xc0] sm:$0xff]
    %v113 = vld [vmem:[#allocation4 + $0xc8] sm:$0xf]
    %v114 = vld [vmem:[#allocation4 + $0xcc] sm:$0xff]
    %v115 = vld [vmem:[#allocation4 + $0xd4] sm:$0xf]
    %v116 = vld [vmem:[#allocation4 + $0xd8] sm:$0xff]
    %v117 = vld [vmem:[#allocation4 + $0xe0] sm:$0xf]
    %v118 = vld [vmem:[#allocation4 + $0xe4] sm:$0xff]
    %v119 = vld [vmem:[#allocation4 + $0xec] sm:$0xf]
    %v120 = vld [vmem:[#allocation4 + $0xf0] sm:$0xff]
    %v121 = vld [vmem:[#allocation4 + $0xf8] sm:$0xf]
    %v122 = vld [vmem:[#allocation4 + $0xfc] sm:$0xff]
    %v123 = vld [vmem:[#allocation4 + $0x104] sm:$0xf]
    %v124 = vld [vmem:[#allocation4 + $0x108] sm:$0xff]
    %v125 = vld [vmem:[#allocation4 + $0x110] sm:$0xf]
    %v126 = vld [vmem:[#allocation4 + $0x114] sm:$0xff]
    %v127 = vld [vmem:[#allocation4 + $0x11c] sm:$0xf]
    %v128 = vld [vmem:[#allocation4 + $0x120] sm:$0xff]
    %v129 = vld [vmem:[#allocation4 + $0x128] sm:$0xf]
    %v130 = vld [vmem:[#allocation4 + $0x12c] sm:$0xff]
    %v131 = vld [vmem:[#allocation4 + $0x134] sm:$0xf]
    %v132 = vld [vmem:[#allocation4 + $0x138] sm:$0xff]
    %v133 = vld [vmem:[#allocation4 + $0x140] sm:$0xf]
    %v134 = vld [vmem:[#allocation4 + $0x144] sm:$0xff]
    %v135 = vld [vmem:[#allocation4 + $0x14c] sm:$0xf]
    %v136 = vld [vmem:[#allocation4 + $0x150] sm:$0xff]
    %v137 = vld [vmem:[#allocation4 + $0x158] sm:$0xf]
    %v138 = vld [vmem:[#allocation4 + $0x15c] sm:$0xff]
    %v139 = vld [vmem:[#allocation4 + $0x164] sm:$0xf]
    %v140 = vld [vmem:[#allocation4 + $0x168] sm:$0xff]
    %v141 = vld [vmem:[#allocation4 + $0x170] sm:$0xf]
    %v142 = vld [vmem:[#allocation4 + $0x174] sm:$0xff]
    %v143 = vld [vmem:[#allocation4 + $0x17c] sm:$0xf]
    %v144 = vld [vmem:[#allocation4 + $0x180] sm:$0xff]
    %v145 = vld [vmem:[#allocation4 + $0x188] sm:$0xf]
    %v146 = vld [vmem:[#allocation4 + $0x18c] sm:$0xff]
    %v147 = vld [vmem:[#allocation4 + $0x194] sm:$0xf]
    %v148 = vld [vmem:[#allocation4 + $0x198] sm:$0xff]
    %v149 = vld [vmem:[#allocation4 + $0x1a0] sm:$0xf]
    %v150 = vld [vmem:[#allocation4 + $0x1a4] sm:$0xff]
    %v151 = vld [vmem:[#allocation4 + $0x1ac] sm:$0xf]
    %v152 = vld [vmem:[#allocation4 + $0x1b0] sm:$0xff]
    %v153 = vld [vmem:[#allocation4 + $0x1b8] sm:$0xf]
    %v154 = vld [vmem:[#allocation4 + $0x1bc] sm:$0xff]
    %v155 = vld [vmem:[#allocation4 + $0x1c4] sm:$0xf]
    %v156 = vld [vmem:[#allocation4 + $0x1c8] sm:$0xff]
    %v157 = vld [vmem:[#allocation4 + $0x1d0] sm:$0xf]
    %v158 = vld [vmem:[#allocation4 + $0x1d4] sm:$0xff]
    %v159 = vld [vmem:[#allocation4 + $0x1dc] sm:$0xf]
    %v160 = vld [vmem:[#allocation4 + $0x1e0] sm:$0xff]
    %v161 = vld [vmem:[#allocation4 + $0x1e8] sm:$0xf]
    %v162 = vld [vmem:[#allocation4 + $0x1ec] sm:$0xff]
    %v163 = vld [vmem:[#allocation4 + $0x1f4] sm:$0xf]
    %v164 = vld [vmem:[#allocation4 + $0x1f8] sm:$0xff]
    %v165 = vld [vmem:[#allocation4 + $0x200] sm:$0xf]
    %v166 = vld [vmem:[#allocation4 + $0x204] sm:$0xff]
    %v167 = vld [vmem:[#allocation4 + $0x20c] sm:$0xf]
    %v168 = vld [vmem:[#allocation4 + $0x210] sm:$0xff]
    %v169 = vld [vmem:[#allocation4 + $0x218] sm:$0xf]
    %v170 = vld [vmem:[#allocation4 + $0x21c] sm:$0xff]
    %v171 = vld [vmem:[#allocation4 + $0x224] sm:$0xf]
    %v172 = vld [vmem:[#allocation4 + $0x228] sm:$0xff]
    %v173 = vld [vmem:[#allocation4 + $0x230] sm:$0xf]
    %v174 = vld [vmem:[#allocation4 + $0x234] sm:$0xff]
    %v175 = vld [vmem:[#allocation4 + $0x23c] sm:$0xf]
    %v176 = vld [vmem:[#allocation4 + $0x240] sm:$0xff]
    %v177 = vld [vmem:[#allocation4 + $0x248] sm:$0xf]
    %v178 = vld [vmem:[#allocation4 + $0x24c] sm:$0xff]
    %v179 = vld [vmem:[#allocation4 + $0x254] sm:$0xf]
    %v180 = vld [vmem:[#allocation4 + $0x258] sm:$0xff]
    %v181 = vld [vmem:[#allocation4 + $0x260] sm:$0xf]
    %v182 = vld [vmem:[#allocation4 + $0x264] sm:$0xff]
    %v183 = vld [vmem:[#allocation4 + $0x26c] sm:$0xf]
    %v184 = vld [vmem:[#allocation4 + $0x270] sm:$0xff]
    %v185 = vld [vmem:[#allocation4 + $0x278] sm:$0xf]
    %v186 = vld [vmem:[#allocation4 + $0x27c] sm:$0xff]
    %v187 = vld [vmem:[#allocation4 + $0x284] sm:$0xf]
    %v188 = vld [vmem:[#allocation4 + $0x288] sm:$0xff]
    %v189 = vld [vmem:[#allocation4 + $0x290] sm:$0xf]
    %v190 = vld [vmem:[#allocation4 + $0x294] sm:$0xff]
    %v191 = vld [vmem:[#allocation4 + $0x29c] sm:$0xf]
    %v192 = vld [vmem:[#allocation4 + $0x2a0] sm:$0xff]
    %v193 = vld [vmem:[#allocation4 + $0x2a8] sm:$0xf]
    %v194 = vld [vmem:[#allocation4 + $0x2ac] sm:$0xff]
    %v195 = vld [vmem:[#allocation4 + $0x2b4] sm:$0xf]
    %v196 = vld [vmem:[#allocation4 + $0x2b8] sm:$0xff]
    %v197 = vld [vmem:[#allocation4 + $0x2c0] sm:$0xf]
    %v198 = vld [vmem:[#allocation4 + $0x2c4] sm:$0xff]
    %v199 = vld [vmem:[#allocation4 + $0x2cc] sm:$0xf]
    %v200 = vld [vmem:[#allocation4 + $0x2d0] sm:$0xff]
    %v201 = vld [vmem:[#allocation4 + $0x2d8] sm:$0xf]
    %v202 = vld [vmem:[#allocation4 + $0x2dc] sm:$0xff]
    %v203 = vld [vmem:[#allocation4 + $0x2e4] sm:$0xf]
    %v204 = vld [vmem:[#allocation4 + $0x2e8] sm:$0xff]
    %v205 = vld [vmem:[#allocation4 + $0x2f0] sm:$0xf]
    %v206 = vld [vmem:[#allocation4 + $0x2f4] sm:$0xff]
    %v207 = vld [vmem:[#allocation4 + $0x2fc] sm:$0xf]
    %v208 = vld [vmem:[#allocation4 + $0x300] sm:$0xff]
    %v209 = vld [vmem:[#allocation4 + $0x308] sm:$0xf]
    %v210 = vld [vmem:[#allocation4 + $0x30c] sm:$0xff]
    %v211 = vld [vmem:[#allocation4 + $0x314] sm:$0xf]
    %v212 = vld [vmem:[#allocation4 + $0x318] sm:$0xff]
    %v213 = vld [vmem:[#allocation4 + $0x320] sm:$0xf]
    %v214 = vld [vmem:[#allocation4 + $0x324] sm:$0xff]
    %v215 = vld [vmem:[#allocation4 + $0x32c] sm:$0xf]
    %v216 = vld [vmem:[#allocation4 + $0x330] sm:$0xff]
    %v217 = vld [vmem:[#allocation4 + $0x338] sm:$0xf]
    %v218 = vld [vmem:[#allocation4 + $0x33c] sm:$0xff]
    %v219 = vld [vmem:[#allocation4 + $0x344] sm:$0xf]
    %v220 = vld [vmem:[#allocation4 + $0x348] sm:$0xff]
    %v221 = vld [vmem:[#allocation4 + $0x350] sm:$0xf]
    %v222 = vld [vmem:[#allocation4 + $0x354] sm:$0xff]
    %v223 = vld [vmem:[#allocation4 + $0x35c] sm:$0xf]
    %v224 = vld [vmem:[#allocation4 + $0x360] sm:$0xff]
    %v225 = vld [vmem:[#allocation4 + $0x368] sm:$0xf]
    %v226 = vld [vmem:[#allocation4 + $0x36c] sm:$0xff]
    %v227 = vld [vmem:[#allocation4 + $0x374] sm:$0xf]
    %v228 = vld [vmem:[#allocation4 + $0x378] sm:$0xff]
    %v229 = vld [vmem:[#allocation4 + $0x380] sm:$0xf]
    %v230 = vld [vmem:[#allocation4 + $0x384] sm:$0xff]
    %v231 = vld [vmem:[#allocation4 + $0x38c] sm:$0xf]
    %v232 = vld [vmem:[#allocation4 + $0x390] sm:$0xff]
    %v233 = vld [vmem:[#allocation4 + $0x398] sm:$0xf]
    %v234 = vld [vmem:[#allocation4 + $0x39c] sm:$0xff]
    %v235 = vld [vmem:[#allocation4 + $0x3a4] sm:$0xf]
    %v236 = vld [vmem:[#allocation4 + $0x3a8] sm:$0xff]
    %v237 = vld [vmem:[#allocation4 + $0x3b0] sm:$0xf]
    %v238 = vld [vmem:[#allocation4 + $0x3b4] sm:$0xff]
    %v239 = vld [vmem:[#allocation4 + $0x3bc] sm:$0xf]
    %v240 = vld [vmem:[#allocation4 + $0x3c0] sm:$0xff]
    %v241 = vld [vmem:[#allocation4 + $0x3c8] sm:$0xf]
    %v242 = vld [vmem:[#allocation4 + $0x3cc] sm:$0xff]
    %v243 = vld [vmem:[#allocation4 + $0x3d4] sm:$0xf]
    %v244 = vld [vmem:[#allocation4 + $0x3d8] sm:$0xff]
    %v245 = vld [vmem:[#allocation4 + $0x3e0] sm:$0xf]
    %v246 = vld [vmem:[#allocation4 + $0x3e4] sm:$0xff]
    %v247 = vld [vmem:[#allocation4 + $0x3ec] sm:$0xf]
    %v248 = vld [vmem:[#allocation4 + $0x3f0] sm:$0xff]
    %v249 = vld [vmem:[#allocation4 + $0x3f8] sm:$0xf]
    %v250 = vld [vmem:[#allocation4 + $0x3fc] sm:$0xff]
    %v251 = vld [vmem:[#allocation4 + $0x404] sm:$0xf]
    %v252 = vld [vmem:[#allocation4 + $0x408] sm:$0xff]
    %v253 = vld [vmem:[#allocation4 + $0x410] sm:$0xf]
    %v254 = vld [vmem:[#allocation4 + $0x414] sm:$0xff]
    %v255 = vld [vmem:[#allocation4 + $0x41c] sm:$0xf]
    %v256 = vld [vmem:[#allocation4 + $0x420] sm:$0xff]
    %v257 = vld [vmem:[#allocation4 + $0x428] sm:$0xf]
    %v258 = vld [vmem:[#allocation4 + $0x42c] sm:$0xff]
    %v259 = vld [vmem:[#allocation4 + $0x434] sm:$0xf]
    %v260 = vld [vmem:[#allocation4 + $0x438] sm:$0xff]
    %v261 = vld [vmem:[#allocation4 + $0x440] sm:$0xf]
    %v262 = vld [vmem:[#allocation4 + $0x444] sm:$0xff]
    %v263 = vld [vmem:[#allocation4 + $0x44c] sm:$0xf]
    %v264 = vld [vmem:[#allocation4 + $0x450] sm:$0xff]
    %v265 = vld [vmem:[#allocation4 + $0x458] sm:$0xf]
    %v266 = vld [vmem:[#allocation4 + $0x45c] sm:$0xff]
    %v267 = vld [vmem:[#allocation4 + $0x464] sm:$0xf]
    %v268 = vld [vmem:[#allocation4 + $0x468] sm:$0xff]
    %v269 = vld [vmem:[#allocation4 + $0x470] sm:$0xf]
    %v270 = vld [vmem:[#allocation4 + $0x474] sm:$0xff]
    %v271 = vld [vmem:[#allocation4 + $0x47c] sm:$0xf]
    %v272 = vld [vmem:[#allocation4 + $0x480] sm:$0xff]
    %v273 = vld [vmem:[#allocation4 + $0x488] sm:$0xf]
    %v274 = vld [vmem:[#allocation4 + $0x48c] sm:$0xff]
    %v275 = vld [vmem:[#allocation4 + $0x494] sm:$0xf]
    %v276 = vld [vmem:[#allocation4 + $0x498] sm:$0xff]
    %v277 = vld [vmem:[#allocation4 + $0x4a0] sm:$0xf]
    %v278 = vld [vmem:[#allocation4 + $0x4a4] sm:$0xff]
    %v279 = vld [vmem:[#allocation4 + $0x4ac] sm:$0xf]
    %v280 = vld [vmem:[#allocation4 + $0x4b0] sm:$0xff]
    %v281 = vld [vmem:[#allocation4 + $0x4b8] sm:$0xf]
    %v282 = vld [vmem:[#allocation4 + $0x4bc] sm:$0xff]
    %v283 = vld [vmem:[#allocation4 + $0x4c4] sm:$0xf]
    %v284 = vld [vmem:[#allocation4 + $0x4c8] sm:$0xff]
    %v285 = vld [vmem:[#allocation4 + $0x4d0] sm:$0xf]
    %v286 = vld [vmem:[#allocation4 + $0x4d4] sm:$0xff]
    %v287 = vld [vmem:[#allocation4 + $0x4dc] sm:$0xf]
    %v288 = vld [vmem:[#allocation4 + $0x4e0] sm:$0xff]
    %v289 = vld [vmem:[#allocation4 + $0x4e8] sm:$0xf]
    %v290 = vld [vmem:[#allocation4 + $0x4ec] sm:$0xff]
    %v291 = vld [vmem:[#allocation4 + $0x4f4] sm:$0xf]
    %v292 = vld [vmem:[#allocation4 + $0x4f8] sm:$0xff]
    %v293 = vld [vmem:[#allocation4 + $0x500] sm:$0xf]
    %v294 = vld [vmem:[#allocation4 + $0x504] sm:$0xff]
    %v295 = vld [vmem:[#allocation4 + $0x50c] sm:$0xf]
    %v512 = vunpack.c.l.b16 %v80
    %v513 = vunpack.c.h.b16 %v80
    %v514 = vunpack.c.l.b16 %v81
    %v515 = vunpack.c.l.b16 %v82
    %v516 = vunpack.c.h.b16 %v82
    %v517 = vunpack.c.l.b16 %v83
    %v518 = vunpack.c.l.b16 %v84
    %v519 = vunpack.c.h.b16 %v84
    %v520 = vunpack.c.l.b16 %v85
    %v521 = vunpack.c.l.b16 %v86
    %v522 = vunpack.c.h.b16 %v86
    %v523 = vunpack.c.l.b16 %v87
    %v524 = vunpack.c.l.b16 %v88
    %v525 = vunpack.c.h.b16 %v88
    %v526 = vunpack.c.l.b16 %v89
    %v527 = vunpack.c.l.b16 %v90
    %v528 = vunpack.c.h.b16 %v90
    %v529 = vunpack.c.l.b16 %v91
    %v530 = vunpack.c.l.b16 %v92
    %v531 = vunpack.c.h.b16 %v92
    %v532 = vunpack.c.l.b16 %v93
    %v533 = vunpack.c.l.b16 %v94
    %v534 = vunpack.c.h.b16 %v94
    %v535 = vunpack.c.l.b16 %v95
    %v536 = vunpack.c.l.b16 %v96
    %v537 = vunpack.c.h.b16 %v96
    %v538 = vunpack.c.l.b16 %v97
    %v539 = vunpack.c.l.b16 %v98
    %v540 = vunpack.c.h.b16 %v98
    %v541 = vunpack.c.l.b16 %v99
    %v542 = vunpack.c.l.b16 %v100
    %v543 = vunpack.c.h.b16 %v100
    %v544 = vunpack.c.l.b16 %v101
    %v545 = vunpack.c.l.b16 %v102
    %v546 = vunpack.c.h.b16 %v102
    %v547 = vunpack.c.l.b16 %v103
    %v548 = vunpack.c.l.b16 %v104
    %v549 = vunpack.c.h.b16 %v104
    %v550 = vunpack.c.l.b16 %v105
    %v551 = vunpack.c.l.b16 %v106
    %v552 = vunpack.c.h.b16 %v106
    %v553 = vunpack.c.l.b16 %v107
    %v554 = vunpack.c.l.b16 %v108
    %v555 = vunpack.c.h.b16 %v108
    %v556 = vunpack.c.l.b16 %v109
    %v557 = vunpack.c.l.b16 %v110
    %v558 = vunpack.c.h.b16 %v110
    %v559 = vunpack.c.l.b16 %v111
    %v560 = vunpack.c.l.b16 %v112
    %v561 = vunpack.c.h.b16 %v112
    %v562 = vunpack.c.l.b16 %v113
    %v563 = vunpack.c.l.b16 %v114
    %v564 = vunpack.c.h.b16 %v114
    %v565 = vunpack.c.l.b16 %v115
    %v566 = vunpack.c.l.b16 %v116
    %v567 = vunpack.c.h.b16 %v116
    %v568 = vunpack.c.l.b16 %v117
    %v569 = vunpack.c.l.b16 %v118
    %v570 = vunpack.c.h.b16 %v118
    %v571 = vunpack.c.l.b16 %v119
    %v572 = vunpack.c.l.b16 %v120
    %v573 = vunpack.c.h.b16 %v120
    %v574 = vunpack.c.l.b16 %v121
    %v575 = vunpack.c.l.b16 %v122
    %v576 = vunpack.c.h.b16 %v122
    %v577 = vunpack.c.l.b16 %v123
    %v578 = vunpack.c.l.b16 %v124
    %v579 = vunpack.c.h.b16 %v124
    %v580 = vunpack.c.l.b16 %v125
    %v581 = vunpack.c.l.b16 %v126
    %v582 = vunpack.c.h.b16 %v126
    %v583 = vunpack.c.l.b16 %v127
    %v584 = vunpack.c.l.b16 %v128
    %v585 = vunpack.c.h.b16 %v128
    %v586 = vunpack.c.l.b16 %v129
    %v587 = vunpack.c.l.b16 %v130
    %v588 = vunpack.c.h.b16 %v130
    %v589 = vunpack.c.l.b16 %v131
    %v590 = vunpack.c.l.b16 %v132
    %v591 = vunpack.c.h.b16 %v132
    %v592 = vunpack.c.l.b16 %v133
    %v593 = vunpack.c.l.b16 %v134
    %v594 = vunpack.c.h.b16 %v134
    %v595 = vunpack.c.l.b16 %v135
    %v596 = vunpack.c.l.b16 %v136
    %v597 = vunpack.c.h.b16 %v136
    %v598 = vunpack.c.l.b16 %v137
    %v599 = vunpack.c.l.b16 %v138
    %v600 = vunpack.c.h.b16 %v138
    %v601 = vunpack.c.l.b16 %v139
    %v602 = vunpack.c.l.b16 %v140
    %v603 = vunpack.c.h.b16 %v140
    %v604 = vunpack.c.l.b16 %v141
    %v605 = vunpack.c.l.b16 %v142
    %v606 = vunpack.c.h.b16 %v142
    %v607 = vunpack.c.l.b16 %v143
    %v608 = vunpack.c.l.b16 %v144
    %v609 = vunpack.c.h.b16 %v144
    %v610 = vunpack.c.l.b16 %v145
    %v611 = vunpack.c.l.b16 %v146
    %v612 = vunpack.c.h.b16 %v146
    %v613 = vunpack.c.l.b16 %v147
    %v614 = vunpack.c.l.b16 %v148
    %v615 = vunpack.c.h.b16 %v148
    %v616 = vunpack.c.l.b16 %v149
    %v617 = vunpack.c.l.b16 %v150
    %v618 = vunpack.c.h.b16 %v150
    %v619 = vunpack.c.l.b16 %v151
    %v620 = vunpack.c.l.b16 %v152
    %v621 = vunpack.c.h.b16 %v152
    %v622 = vunpack.c.l.b16 %v153
    %v623 = vunpack.c.l.b16 %v154
    %v624 = vunpack.c.h.b16 %v154
    %v625 = vunpack.c.l.b16 %v155
    %v626 = vunpack.c.l.b16 %v156
    %v627 = vunpack.c.h.b16 %v156
    %v628 = vunpack.c.l.b16 %v157
    %v629 = vunpack.c.l.b16 %v158
    %v630 = vunpack.c.h.b16 %v158
    %v631 = vunpack.c.l.b16 %v159
    %v632 = vunpack.c.l.b16 %v160
    %v633 = vunpack.c.h.b16 %v160
    %v634 = vunpack.c.l.b16 %v161
    %v635 = vunpack.c.l.b16 %v162
    %v636 = vunpack.c.h.b16 %v162
    %v637 = vunpack.c.l.b16 %v163
    %v638 = vunpack.c.l.b16 %v164
    %v639 = vunpack.c.h.b16 %v164
    %v640 = vunpack.c.l.b16 %v165
    %v641 = vunpack.c.l.b16 %v166
    %v642 = vunpack.c.h.b16 %v166
    %v643 = vunpack.c.l.b16 %v167
    %v644 = vunpack.c.l.b16 %v168
    %v645 = vunpack.c.h.b16 %v168
    %v646 = vunpack.c.l.b16 %v169
    %v647 = vunpack.c.l.b16 %v170
    %v648 = vunpack.c.h.b16 %v170
    %v649 = vunpack.c.l.b16 %v171
    %v650 = vunpack.c.l.b16 %v172
    %v651 = vunpack.c.h.b16 %v172
    %v652 = vunpack.c.l.b16 %v173
    %v653 = vunpack.c.l.b16 %v174
    %v654 = vunpack.c.h.b16 %v174
    %v655 = vunpack.c.l.b16 %v175
    %v656 = vunpack.c.l.b16 %v176
    %v657 = vunpack.c.h.b16 %v176
    %v658 = vunpack.c.l.b16 %v177
    %v659 = vunpack.c.l.b16 %v178
    %v660 = vunpack.c.h.b16 %v178
    %v661 = vunpack.c.l.b16 %v179
    %v662 = vunpack.c.l.b16 %v180
    %v663 = vunpack.c.h.b16 %v180
    %v664 = vunpack.c.l.b16 %v181
    %v665 = vunpack.c.l.b16 %v182
    %v666 = vunpack.c.h.b16 %v182
    %v667 = vunpack.c.l.b16 %v183
    %v668 = vunpack.c.l.b16 %v184
    %v669 = vunpack.c.h.b16 %v184
    %v670 = vunpack.c.l.b16 %v185
    %v671 = vunpack.c.l.b16 %v186
    %v672 = vunpack.c.h.b16 %v186
    %v673 = vunpack.c.l.b16 %v187
    %v674 = vunpack.c.l.b16 %v188
    %v675 = vunpack.c.h.b16 %v188
    %v676 = vunpack.c.l.b16 %v189
    %v677 = vunpack.c.l.b16 %v190
    %v678 = vunpack.c.h.b16 %v190
    %v679 = vunpack.c.l.b16 %v191
    %v680 = vunpack.c.l.b16 %v192
    %v681 = vunpack.c.h.b16 %v192
    %v682 = vunpack.c.l.b16 %v193
    %v683 = vunpack.c.l.b16 %v194
    %v684 = vunpack.c.h.b16 %v194
    %v685 = vunpack.c.l.b16 %v195
    %v686 = vunpack.c.l.b16 %v196
    %v687 = vunpack.c.h.b16 %v196
    %v688 = vunpack.c.l.b16 %v197
    %v689 = vunpack.c.l.b16 %v198
    %v690 = vunpack.c.h.b16 %v198
    %v691 = vunpack.c.l.b16 %v199
    %v692 = vunpack.c.l.b16 %v200
    %v693 = vunpack.c.h.b16 %v200
    %v694 = vunpack.c.l.b16 %v201
    %v695 = vunpack.c.l.b16 %v202
    %v696 = vunpack.c.h.b16 %v202
    %v697 = vunpack.c.l.b16 %v203
    %v698 = vunpack.c.l.b16 %v204
    %v699 = vunpack.c.h.b16 %v204
    %v700 = vunpack.c.l.b16 %v205
    %v701 = vunpack.c.l.b16 %v206
    %v702 = vunpack.c.h.b16 %v206
    %v703 = vunpack.c.l.b16 %v207
    %v704 = vunpack.c.l.b16 %v208
    %v705 = vunpack.c.h.b16 %v208
    %v706 = vunpack.c.l.b16 %v209
    %v707 = vunpack.c.l.b16 %v210
    %v708 = vunpack.c.h.b16 %v210
    %v709 = vunpack.c.l.b16 %v211
    %v710 = vunpack.c.l.b16 %v212
    %v711 = vunpack.c.h.b16 %v212
    %v712 = vunpack.c.l.b16 %v213
    %v713 = vunpack.c.l.b16 %v214
    %v714 = vunpack.c.h.b16 %v214
    %v715 = vunpack.c.l.b16 %v215
    %v716 = vunpack.c.l.b16 %v216
    %v717 = vunpack.c.h.b16 %v216
    %v718 = vunpack.c.l.b16 %v217
    %v719 = vunpack.c.l.b16 %v218
    %v720 = vunpack.c.h.b16 %v218
    %v721 = vunpack.c.l.b16 %v219
    %v722 = vunpack.c.l.b16 %v220
    %v723 = vunpack.c.h.b16 %v220
    %v724 = vunpack.c.l.b16 %v221
    %v725 = vunpack.c.l.b16 %v222
    %v726 = vunpack.c.h.b16 %v222
    %v727 = vunpack.c.l.b16 %v223
    %v728 = vunpack.c.l.b16 %v224
    %v729 = vunpack.c.h.b16 %v224
    %v730 = vunpack.c.l.b16 %v225
    %v731 = vunpack.c.l.b16 %v226
    %v732 = vunpack.c.h.b16 %v226
    %v733 = vunpack.c.l.b16 %v227
    %v734 = vunpack.c.l.b16 %v228
    %v735 = vunpack.c.h.b16 %v228
    %v736 = vunpack.c.l.b16 %v229
    %v737 = vunpack.c.l.b16 %v230
    %v738 = vunpack.c.h.b16 %v230
    %v739 = vunpack.c.l.b16 %v231
    %v740 = vunpack.c.l.b16 %v232
    %v741 = vunpack.c.h.b16 %v232
    %v742 = vunpack.c.l.b16 %v233
    %v743 = vunpack.c.l.b16 %v234
    %v744 = vunpack.c.h.b16 %v234
    %v745 = vunpack.c.l.b16 %v235
    %v746 = vunpack.c.l.b16 %v236
    %v747 = vunpack.c.h.b16 %v236
    %v748 = vunpack.c.l.b16 %v237
    %v749 = vunpack.c.l.b16 %v238
    %v750 = vunpack.c.h.b16 %v238
    %v751 = vunpack.c.l.b16 %v239
    %v752 = vunpack.c.l.b16 %v240
    %v753 = vunpack.c.h.b16 %v240
    %v754 = vunpack.c.l.b16 %v241
    %v755 = vunpack.c.l.b16 %v242
    %v756 = vunpack.c.h.b16 %v242
    %v757 = vunpack.c.l.b16 %v243
    %v758 = vunpack.c.l.b16 %v244
    %v759 = vunpack.c.h.b16 %v244
    %v760 = vunpack.c.l.b16 %v245
    %v761 = vunpack.c.l.b16 %v246
    %v762 = vunpack.c.h.b16 %v246
    %v763 = vunpack.c.l.b16 %v247
    %v764 = vunpack.c.l.b16 %v248
    %v765 = vunpack.c.h.b16 %v248
    %v766 = vunpack.c.l.b16 %v249
    %v767 = vunpack.c.l.b16 %v250
    %v768 = vunpack.c.h.b16 %v250
    %v769 = vunpack.c.l.b16 %v251
    %v770 = vunpack.c.l.b16 %v252
    %v771 = vunpack.c.h.b16 %v252
    %v772 = vunpack.c.l.b16 %v253
    %v773 = vunpack.c.l.b16 %v254
    %v774 = vunpack.c.h.b16 %v254
    %v775 = vunpack.c.l.b16 %v255
    %v776 = vunpack.c.l.b16 %v256
    %v777 = vunpack.c.h.b16 %v256
    %v778 = vunpack.c.l.b16 %v257
    %v779 = vunpack.c.l.b16 %v258
    %v780 = vunpack.c.h.b16 %v258
    %v781 = vunpack.c.l.b16 %v259
    %v782 = vunpack.c.l.b16 %v260
    %v783 = vunpack.c.h.b16 %v260
    %v784 = vunpack.c.l.b16 %v261
    %v785 = vunpack.c.l.b16 %v262
    %v786 = vunpack.c.h.b16 %v262
    %v787 = vunpack.c.l.b16 %v263
    %v788 = vunpack.c.l.b16 %v264
    %v789 = vunpack.c.h.b16 %v264
    %v790 = vunpack.c.l.b16 %v265
    %v791 = vunpack.c.l.b16 %v266
    %v792 = vunpack.c.h.b16 %v266
    %v793 = vunpack.c.l.b16 %v267
    %v794 = vunpack.c.l.b16 %v268
    %v795 = vunpack.c.h.b16 %v268
    %v796 = vunpack.c.l.b16 %v269
    %v797 = vunpack.c.l.b16 %v270
    %v798 = vunpack.c.h.b16 %v270
    %v799 = vunpack.c.l.b16 %v271
    %v800 = vunpack.c.l.b16 %v272
    %v801 = vunpack.c.h.b16 %v272
    %v802 = vunpack.c.l.b16 %v273
    %v803 = vunpack.c.l.b16 %v274
    %v804 = vunpack.c.h.b16 %v274
    %v805 = vunpack.c.l.b16 %v275
    %v806 = vunpack.c.l.b16 %v276
    %v807 = vunpack.c.h.b16 %v276
    %v808 = vunpack.c.l.b16 %v277
    %v809 = vunpack.c.l.b16 %v278
    %v810 = vunpack.c.h.b16 %v278
    %v811 = vunpack.c.l.b16 %v279
    %v812 = vunpack.c.l.b16 %v280
    %v813 = vunpack.c.h.b16 %v280
    %v814 = vunpack.c.l.b16 %v281
    %v815 = vunpack.c.l.b16 %v282
    %v816 = vunpack.c.h.b16 %v282
    %v817 = vunpack.c.l.b16 %v283
    %v818 = vunpack.c.l.b16 %v284
    %v819 = vunpack.c.h.b16 %v284
    %v820 = vunpack.c.l.b16 %v285
    %v821 = vunpack.c.l.b16 %v286
    %v822 = vunpack.c.h.b16 %v286
    %v823 = vunpack.c.l.b16 %v287
    %v824 = vunpack.c.l.b16 %v288
    %v825 = vunpack.c.h.b16 %v288
    %v826 = vunpack.c.l.b16 %v289
    %v827 = vunpack.c.l.b16 %v290
    %v828 = vunpack.c.h.b16 %v290
    %v829 = vunpack.c.l.b16 %v291
    %v830 = vunpack.c.l.b16 %v292
    %v831 = vunpack.c.h.b16 %v292
    %v832 = vunpack.c.l.b16 %v293
    %v833 = vunpack.c.l.b16 %v294
    %v834 = vunpack.c.h.b16 %v294
    %v835 = vunpack.c.l.b16 %v295
    %v836 = vpack.c.b16 %v515, %v512
    %v837 = vpack.c.b16 %v516, %v513
    %v838 = vpack.c.b16 %v517, %v514
    %v839 = vpack.c.b16 %v521, %v518
    %v840 = vpack.c.b16 %v522, %v519
    %v841 = vpack.c.b16 %v523, %v520
    %v842 = vpack.c.b16 %v527, %v524
    %v843 = vpack.c.b16 %v528, %v525
    %v844 = vpack.c.b16 %v529, %v526
    %v845 = vpack.c.b16 %v533, %v530
    %v846 = vpack.c.b16 %v534, %v531
    %v847 = vpack.c.b16 %v535, %v532
    %v848 = vpack.c.b16 %v539, %v536
    %v849 = vpack.c.b16 %v540, %v537
    %v850 = vpack.c.b16 %v541, %v538
    %v851 = vpack.c.b16 %v545, %v542
    %v852 = vpack.c.b16 %v546, %v543
    %v853 = vpack.c.b16 %v547, %v544
    %v854 = vpack.c.b16 %v551, %v548
    %v855 = vpack.c.b16 %v552, %v549
    %v856 = vpack.c.b16 %v553, %v550
    %v857 = vpack.c.b16 %v557, %v554
    %v858 = vpack.c.b16 %v558, %v555
    %v859 = vpack.c.b16 %v559, %v556
    %v860 = vpack.c.b16 %v563, %v560
    %v861 = vpack.c.b16 %v564, %v561
    %v862 = vpack.c.b16 %v565, %v562
    %v863 = vpack.c.b16 %v569, %v566
    %v864 = vpack.c.b16 %v570, %v567
    %v865 = vpack.c.b16 %v571, %v568
    %v866 = vpack.c.b16 %v575, %v572
    %v867 = vpack.c.b16 %v576, %v573
    %v868 = vpack.c.b16 %v577, %v574
    %v869 = vpack.c.b16 %v581, %v578
    %v870 = vpack.c.b16 %v582, %v579
    %v871 = vpack.c.b16 %v583, %v580
    %v872 = vpack.c.b16 %v587, %v584
    %v873 = vpack.c.b16 %v588, %v585
    %v874 = vpack.c.b16 %v589, %v586
    %v875 = vpack.c.b16 %v593, %v590
    %v876 = vpack.c.b16 %v594, %v591
    %v877 = vpack.c.b16 %v595, %v592
    %v878 = vpack.c.b16 %v599, %v596
    %v879 = vpack.c.b16 %v600, %v597
    %v880 = vpack.c.b16 %v601, %v598
    %v881 = vpack.c.b16 %v605, %v602
    %v882 = vpack.c.b16 %v606, %v603
    %v883 = vpack.c.b16 %v607, %v604
    %v884 = vpack.c.b16 %v611, %v608
    %v885 = vpack.c.b16 %v612, %v609
    %v886 = vpack.c.b16 %v613, %v610
    %v887 = vpack.c.b16 %v617, %v614
    %v888 = vpack.c.b16 %v618, %v615
    %v889 = vpack.c.b16 %v619, %v616
    %v890 = vpack.c.b16 %v623, %v620
    %v891 = vpack.c.b16 %v624, %v621
    %v892 = vpack.c.b16 %v625, %v622
    %v893 = vpack.c.b16 %v629, %v626
    %v894 = vpack.c.b16 %v630, %v627
    %v895 = vpack.c.b16 %v631, %v628
    %v896 = vpack.c.b16 %v635, %v632
    %v897 = vpack.c.b16 %v636, %v633
    %v898 = vpack.c.b16 %v637, %v634
    %v899 = vpack.c.b16 %v641, %v638
    %v900 = vpack.c.b16 %v642, %v639
    %v901 = vpack.c.b16 %v643, %v640
    %v902 = vpack.c.b16 %v647, %v644
    %v903 = vpack.c.b16 %v648, %v645
    %v904 = vpack.c.b16 %v649, %v646
    %v905 = vpack.c.b16 %v653, %v650
    %v906 = vpack.c.b16 %v654, %v651
    %v907 = vpack.c.b16 %v655, %v652
    %v908 = vpack.c.b16 %v659, %v656
    %v909 = vpack.c.b16 %v660, %v657
    %v910 = vpack.c.b16 %v661, %v658
    %v911 = vpack.c.b16 %v665, %v662
    %v912 = vpack.c.b16 %v666, %v663
    %v913 = vpack.c.b16 %v667, %v664
    %v914 = vpack.c.b16 %v671, %v668
    %v915 = vpack.c.b16 %v672, %v669
    %v916 = vpack.c.b16 %v673, %v670
    %v917 = vpack.c.b16 %v677, %v674
    %v918 = vpack.c.b16 %v678, %v675
    %v919 = vpack.c.b16 %v679, %v676
    %v920 = vpack.c.b16 %v683, %v680
    %v921 = vpack.c.b16 %v684, %v681
    %v922 = vpack.c.b16 %v685, %v682
    %v923 = vpack.c.b16 %v689, %v686
    %v924 = vpack.c.b16 %v690, %v687
    %v925 = vpack.c.b16 %v691, %v688
    %v926 = vpack.c.b16 %v695, %v692
    %v927 = vpack.c.b16 %v696, %v693
    %v928 = vpack.c.b16 %v697, %v694
    %v929 = vpack.c.b16 %v701, %v698
    %v930 = vpack.c.b16 %v702, %v699
    %v931 = vpack.c.b16 %v703, %v700
    %v932 = vpack.c.b16 %v707, %v704
    %v933 = vpack.c.b16 %v708, %v705
    %v934 = vpack.c.b16 %v709, %v706
    %v935 = vpack.c.b16 %v713, %v710
    %v936 = vpack.c.b16 %v714, %v711
    %v937 = vpack.c.b16 %v715, %v712
    %v938 = vpack.c.b16 %v719, %v716
    %v939 = vpack.c.b16 %v720, %v717
    %v940 = vpack.c.b16 %v721, %v718
    %v941 = vpack.c.b16 %v725, %v722
    %v942 = vpack.c.b16 %v726, %v723
    %v943 = vpack.c.b16 %v727, %v724
    %v944 = vpack.c.b16 %v731, %v728
    %v945 = vpack.c.b16 %v732, %v729
    %v946 = vpack.c.b16 %v733, %v730
    %v947 = vpack.c.b16 %v737, %v734
    %v948 = vpack.c.b16 %v738, %v735
    %v949 = vpack.c.b16 %v739, %v736
    %v950 = vpack.c.b16 %v743, %v740
    %v951 = vpack.c.b16 %v744, %v741
    %v952 = vpack.c.b16 %v745, %v742
    %v953 = vpack.c.b16 %v749, %v746
    %v954 = vpack.c.b16 %v750, %v747
    %v955 = vpack.c.b16 %v751, %v748
    %v956 = vpack.c.b16 %v755, %v752
    %v957 = vpack.c.b16 %v756, %v753
    %v958 = vpack.c.b16 %v757, %v754
    %v959 = vpack.c.b16 %v761, %v758
    %v960 = vpack.c.b16 %v762, %v759
    %v961 = vpack.c.b16 %v763, %v760
    %v962 = vpack.c.b16 %v767, %v764
    %v963 = vpack.c.b16 %v768, %v765
    %v964 = vpack.c.b16 %v769, %v766
    %v965 = vpack.c.b16 %v773, %v770
    %v966 = vpack.c.b16 %v774, %v771
    %v967 = vpack.c.b16 %v775, %v772
    %v968 = vpack.c.b16 %v779, %v776
    %v969 = vpack.c.b16 %v780, %v777
    %v970 = vpack.c.b16 %v781, %v778
    %v971 = vpack.c.b16 %v785, %v782
    %v972 = vpack.c.b16 %v786, %v783
    %v973 = vpack.c.b16 %v787, %v784
    %v974 = vpack.c.b16 %v791, %v788
    %v975 = vpack.c.b16 %v792, %v789
    %v976 = vpack.c.b16 %v793, %v790
    %v977 = vpack.c.b16 %v797, %v794
    %v978 = vpack.c.b16 %v798, %v795
    %v979 = vpack.c.b16 %v799, %v796
    %v980 = vpack.c.b16 %v803, %v800
    %v981 = vpack.c.b16 %v804, %v801
    %v982 = vpack.c.b16 %v805, %v802
    %v983 = vpack.c.b16 %v809, %v806
    %v984 = vpack.c.b16 %v810, %v807
    %v985 = vpack.c.b16 %v811, %v808
    %v986 = vpack.c.b16 %v815, %v812
    %v987 = vpack.c.b16 %v816, %v813
    %v988 = vpack.c.b16 %v817, %v814
    %v989 = vpack.c.b16 %v821, %v818
    %v990 = vpack.c.b16 %v822, %v819
    %v991 = vpack.c.b16 %v823, %v820
    %v992 = vpack.c.b16 %v827, %v824
    %v993 = vpack.c.b16 %v828, %v825
    %v994 = vpack.c.b16 %v829, %v826
    %v995 = vpack.c.b16 %v833, %v830
    %v996 = vpack.c.b16 %v834, %v831
    %v997 = vpack.c.b16 %v835, %v832
    %vm1160 = vcmask 785408
    %v1162 = vsel %vm1160, %v79, 0
    %1164 = vmatprep.subr.bf16.mxu0 %v837
    %1165 = vmatpush1.bf16.msra.mxu0 %v836
    %1166 = vmatprep.subr.bf16.mxu0 %v840
    %1167 = vmatpush1.bf16.msra.mxu0 %v839
    %1168 = vmatprep.subr.bf16.mxu0 %v843
    %1169 = vmatpush1.bf16.msra.mxu0 %v842
    %1170 = vmatprep.subr.bf16.mxu0 %v846
    %1171 = vmatpush1.bf16.msra.mxu0 %v845
    %1172 = vmatprep.subr.bf16.mxu0 %v849
    %1173 = vmatpush1.bf16.msra.mxu0 %v848
    %1174 = vmatprep.subr.bf16.mxu0 %v852
    %1175 = vmatpush1.bf16.msra.mxu0 %v851
    %1176 = vmatprep.subr.bf16.mxu0 %v855
    %1177 = vmatpush1.bf16.msra.mxu0 %v854
    %1178 = vmatprep.subr.bf16.mxu0 %v858
    %1179 = vmatpush1.bf16.msra.mxu0 %v857
    %1180 = vmatprep.subr.bf16.mxu0 %v861
    %1181 = vmatpush1.bf16.msra.mxu0 %v860
    %1182 = vmatprep.subr.bf16.mxu0 %v864
    %1183 = vmatpush1.bf16.msra.mxu0 %v863
    %1184 = vmatprep.subr.bf16.mxu0 %v867
    %1185 = vmatpush1.bf16.msra.mxu0 %v866
    %1186 = vmatprep.subr.bf16.mxu0 %v870
    %1187 = vmatpush1.bf16.msra.mxu0 %v869
    %1188 = vmatprep.subr.bf16.mxu0 %v873
    %1189 = vmatpush1.bf16.msra.mxu0 %v872
    %1190 = vmatprep.subr.bf16.mxu0 %v876
    %1191 = vmatpush1.bf16.msra.mxu0 %v875
    %1192 = vmatprep.subr.bf16.mxu0 %v879
    %1193 = vmatpush1.bf16.msra.mxu0 %v878
    %1194 = vmatprep.subr.bf16.mxu0 %v882
    %1195 = vmatpush1.bf16.msra.mxu0 %v881
    %1196 = vmatprep.mubr.bf16.mxu0 %v74
    %1197 = vmatmul.mubr.bf16.gmra.mrb[0].mxu0 %v73
    %v1198 = vpop.f32.mrb[0].mxu0
    %v1199 = vadd.f32 0.0, %v1198
    %v1200 = vpop.f32.mrb[0].mxu0
    %v1201 = vadd.f32 0.0, %v1200
    %v1202 = vpop.f32.mrb[0].mxu0
    %v1203 = vpop.f32.mrb[0].mxu0
    %1204 = vdwg.mxu0
    %1205 = vmatprep.subr.bf16.mxu0 %v885
    %1206 = vmatpush1.bf16.msra.mxu0 %v884
    %1207 = vmatprep.subr.bf16.mxu0 %v888
    %1208 = vmatpush1.bf16.msra.mxu0 %v887
    %1209 = vmatprep.subr.bf16.mxu0 %v891
    %1210 = vmatpush1.bf16.msra.mxu0 %v890
    %1211 = vmatprep.subr.bf16.mxu0 %v894
    %1212 = vmatpush1.bf16.msra.mxu0 %v893
    %1213 = vmatprep.subr.bf16.mxu0 %v897
    %1214 = vmatpush1.bf16.msra.mxu0 %v896
    %1215 = vmatprep.subr.bf16.mxu0 %v900
    %1216 = vmatpush1.bf16.msra.mxu0 %v899
    %1217 = vmatprep.subr.bf16.mxu0 %v903
    %1218 = vmatpush1.bf16.msra.mxu0 %v902
    %1219 = vmatprep.subr.bf16.mxu0 %v906
    %1220 = vmatpush1.bf16.msra.mxu0 %v905
    %1221 = vmatprep.subr.bf16.mxu0 %v909
    %1222 = vmatpush1.bf16.msra.mxu0 %v908
    %1223 = vmatprep.subr.bf16.mxu0 %v912
    %1224 = vmatpush1.bf16.msra.mxu0 %v911
    %1225 = vmatprep.subr.bf16.mxu0 %v915
    %1226 = vmatpush1.bf16.msra.mxu0 %v914
    %1227 = vmatprep.subr.bf16.mxu0 %v918
    %1228 = vmatpush1.bf16.msra.mxu0 %v917
    %1229 = vmatprep.subr.bf16.mxu0 %v921
    %1230 = vmatpush1.bf16.msra.mxu0 %v920
    %1231 = vmatprep.subr.bf16.mxu0 %v924
    %1232 = vmatpush1.bf16.msra.mxu0 %v923
    %1233 = vmatprep.subr.bf16.mxu0 %v927
    %1234 = vmatpush1.bf16.msra.mxu0 %v926
    %1235 = vmatprep.subr.bf16.mxu0 %v930
    %1236 = vmatpush1.bf16.msra.mxu0 %v929
    %1237 = vmatprep.mubr.bf16.mxu0 %v76
    %1238 = vmatmul.mubr.bf16.gmra.mrb[0].mxu0 %v75
    %v1239 = vpop.f32.mrb[0].mxu0
    %v1240 = vadd.f32 %v1199, %v1239
    %v1241 = vpop.f32.mrb[0].mxu0
    %v1242 = vadd.f32 %v1201, %v1241
    %v1243 = vpop.f32.mrb[0].mxu0
    %v1244 = vpop.f32.mrb[0].mxu0
    %1245 = vdwg.mxu0
    %1246 = vmatprep.subr.bf16.mxu0 %v933
    %1247 = vmatpush1.bf16.msra.mxu0 %v932
    %1248 = vmatprep.subr.bf16.mxu0 %v936
    %1249 = vmatpush1.bf16.msra.mxu0 %v935
    %1250 = vmatprep.subr.bf16.mxu0 %v939
    %1251 = vmatpush1.bf16.msra.mxu0 %v938
    %1252 = vmatprep.subr.bf16.mxu0 %v942
    %1253 = vmatpush1.bf16.msra.mxu0 %v941
    %1254 = vmatprep.subr.bf16.mxu0 %v945
    %1255 = vmatpush1.bf16.msra.mxu0 %v944
    %1256 = vmatprep.subr.bf16.mxu0 %v948
    %1257 = vmatpush1.bf16.msra.mxu0 %v947
    %1258 = vmatprep.subr.bf16.mxu0 %v951
    %1259 = vmatpush1.bf16.msra.mxu0 %v950
    %1260 = vmatprep.subr.bf16.mxu0 %v954
    %1261 = vmatpush1.bf16.msra.mxu0 %v953
    %1262 = vmatprep.subr.bf16.mxu0 %v957
    %1263 = vmatpush1.bf16.msra.mxu0 %v956
    %1264 = vmatprep.subr.bf16.mxu0 %v960
    %1265 = vmatpush1.bf16.msra.mxu0 %v959
    %1266 = vmatprep.subr.bf16.mxu0 %v963
    %1267 = vmatpush1.bf16.msra.mxu0 %v962
    %1268 = vmatprep.subr.bf16.mxu0 %v966
    %1269 = vmatpush1.bf16.msra.mxu0 %v965
    %1270 = vmatprep.subr.bf16.mxu0 %v969
    %1271 = vmatpush1.bf16.msra.mxu0 %v968
    %1272 = vmatprep.subr.bf16.mxu0 %v972
    %1273 = vmatpush1.bf16.msra.mxu0 %v971
    %1274 = vmatprep.subr.bf16.mxu0 %v975
    %1275 = vmatpush1.bf16.msra.mxu0 %v974
    %1276 = vmatprep.subr.bf16.mxu0 %v978
    %1277 = vmatpush1.bf16.msra.mxu0 %v977
    %1278 = vmatprep.mubr.bf16.mxu0 %v78
    %1279 = vmatmul.mubr.bf16.gmra.mrb[0].mxu0 %v77
    %v1280 = vpop.f32.mrb[0].mxu0
    %v1281 = vadd.f32 %v1240, %v1280
    %v1282 = vpop.f32.mrb[0].mxu0
    %v1283 = vadd.f32 %v1242, %v1282
    %v1284 = vpop.f32.mrb[0].mxu0
    %v1285 = vpop.f32.mrb[0].mxu0
    %1286 = vdwg.mxu0
    %1287 = vmatprep.subr.bf16.mxu0 %v981
    %1288 = vmatpush1.bf16.msra.mxu0 %v980
    %1289 = vmatprep.subr.bf16.mxu0 %v984
    %1290 = vmatpush1.bf16.msra.mxu0 %v983
    %1291 = vmatprep.subr.bf16.mxu0 %v987
    %1292 = vmatpush1.bf16.msra.mxu0 %v986
    %1293 = vmatprep.subr.bf16.mxu0 %v990
    %1294 = vmatpush1.bf16.msra.mxu0 %v989
    %1295 = vmatprep.subr.bf16.mxu0 %v993
    %1296 = vmatpush1.bf16.msra.mxu0 %v992
    %1297 = vmatprep.subr.bf16.mxu0 %v996
    %1298 = vmatpush1.bf16.msra.mxu0 %v995
    %1299 = vmatprep.subr.bf16.mxu0 0
    %1300 = vmatpush1.bf16.msra.mxu0 0
    %1301 = vmatprep.subr.bf16.mxu0 0
    %1302 = vmatpush1.bf16.msra.mxu0 0
    %1303 = vmatprep.subr.bf16.mxu0 0
    %1304 = vmatpush1.bf16.msra.mxu0 0
    %1305 = vmatprep.subr.bf16.mxu0 0
    %1306 = vmatpush1.bf16.msra.mxu0 0
    %1307 = vmatprep.subr.bf16.mxu0 0
    %1308 = vmatpush1.bf16.msra.mxu0 0
    %1309 = vmatprep.subr.bf16.mxu0 0
    %1310 = vmatpush1.bf16.msra.mxu0 0
    %1311 = vmatprep.subr.bf16.mxu0 0
    %1312 = vmatpush1.bf16.msra.mxu0 0
    %1313 = vmatprep.subr.bf16.mxu0 0
    %1314 = vmatpush1.bf16.msra.mxu0 0
    %1315 = vmatprep.subr.bf16.mxu0 0
    %1316 = vmatpush1.bf16.msra.mxu0 0
    %1317 = vmatprep.subr.bf16.mxu0 0
    %1318 = vmatpush1.bf16.msra.mxu0 0
    %1319 = vmatprep.mubr.bf16.mxu0 0
    %1320 = vmatmul.mubr.bf16.gmra.mrb[0].mxu0 %v1162
    %v1321 = vpop.f32.mrb[0].mxu0
    %v1322 = vadd.f32 %v1281, %v1321
    %v1323 = vpop.f32.mrb[0].mxu0
    %v1324 = vadd.f32 %v1283, %v1323
    %v1325 = vpop.f32.mrb[0].mxu0
    %v1326 = vpop.f32.mrb[0].mxu0
    %1327 = vdwg.mxu0
    %1328 = vmatprep.subr.bf16.mxu0 0
    %1329 = vmatpush1.bf16.msra.mxu0 %v838
    %1330 = vmatprep.subr.bf16.mxu0 0
    %1331 = vmatpush1.bf16.msra.mxu0 %v841
    %1332 = vmatprep.subr.bf16.mxu0 0
    %1333 = vmatpush1.bf16.msra.mxu0 %v844
    %1334 = vmatprep.subr.bf16.mxu0 0
    %1335 = vmatpush1.bf16.msra.mxu0 %v847
    %1336 = vmatprep.subr.bf16.mxu0 0
    %1337 = vmatpush1.bf16.msra.mxu0 %v850
    %1338 = vmatprep.subr.bf16.mxu0 0
    %1339 = vmatpush1.bf16.msra.mxu0 %v853
    %1340 = vmatprep.subr.bf16.mxu0 0
    %1341 = vmatpush1.bf16.msra.mxu0 %v856
    %1342 = vmatprep.subr.bf16.mxu0 0
    %1343 = vmatpush1.bf16.msra.mxu0 %v859
    %1344 = vmatprep.subr.bf16.mxu0 0
    %1345 = vmatpush1.bf16.msra.mxu0 %v862
    %1346 = vmatprep.subr.bf16.mxu0 0
    %1347 = vmatpush1.bf16.msra.mxu0 %v865
    %1348 = vmatprep.subr.bf16.mxu0 0
    %1349 = vmatpush1.bf16.msra.mxu0 %v868
    %1350 = vmatprep.subr.bf16.mxu0 0
    %1351 = vmatpush1.bf16.msra.mxu0 %v871
    %1352 = vmatprep.subr.bf16.mxu0 0
    %1353 = vmatpush1.bf16.msra.mxu0 %v874
    %1354 = vmatprep.subr.bf16.mxu0 0
    %1355 = vmatpush1.bf16.msra.mxu0 %v877
    %1356 = vmatprep.subr.bf16.mxu0 0
    %1357 = vmatpush1.bf16.msra.mxu0 %v880
    %1358 = vmatprep.subr.bf16.mxu0 0
    %1359 = vmatpush1.bf16.msra.mxu0 %v883
    %1360 = vmatprep.mubr.bf16.mxu0 %v74
    %1361 = vmatmul.mubr.bf16.gmra.mrb[0].mxu0 %v73
    %v1362 = vpop.f32.mrb[0].mxu0
    %v1363 = vadd.f32 0.0, %v1362
    %v1364 = vpop.f32.mrb[0].mxu0
    %v1365 = vpop.f32.mrb[0].mxu0
    %v1366 = vpop.f32.mrb[0].mxu0
    %1367 = vdwg.mxu0
    %1368 = vmatprep.subr.bf16.mxu0 0
    %1369 = vmatpush1.bf16.msra.mxu0 %v886
    %1370 = vmatprep.subr.bf16.mxu0 0
    %1371 = vmatpush1.bf16.msra.mxu0 %v889
    %1372 = vmatprep.subr.bf16.mxu0 0
    %1373 = vmatpush1.bf16.msra.mxu0 %v892
    %1374 = vmatprep.subr.bf16.mxu0 0
    %1375 = vmatpush1.bf16.msra.mxu0 %v895
    %1376 = vmatprep.subr.bf16.mxu0 0
    %1377 = vmatpush1.bf16.msra.mxu0 %v898
    %1378 = vmatprep.subr.bf16.mxu0 0
    %1379 = vmatpush1.bf16.msra.mxu0 %v901
    %1380 = vmatprep.subr.bf16.mxu0 0
    %1381 = vmatpush1.bf16.msra.mxu0 %v904
    %1382 = vmatprep.subr.bf16.mxu0 0
    %1383 = vmatpush1.bf16.msra.mxu0 %v907
    %1384 = vmatprep.subr.bf16.mxu0 0
    %1385 = vmatpush1.bf16.msra.mxu0 %v910
    %1386 = vmatprep.subr.bf16.mxu0 0
    %1387 = vmatpush1.bf16.msra.mxu0 %v913
    %1388 = vmatprep.subr.bf16.mxu0 0
    %1389 = vmatpush1.bf16.msra.mxu0 %v916
    %1390 = vmatprep.subr.bf16.mxu0 0
    %1391 = vmatpush1.bf16.msra.mxu0 %v919
    %1392 = vmatprep.subr.bf16.mxu0 0
    %1393 = vmatpush1.bf16.msra.mxu0 %v922
    %1394 = vmatprep.subr.bf16.mxu0 0
    %1395 = vmatpush1.bf16.msra.mxu0 %v925
    %1396 = vmatprep.subr.bf16.mxu0 0
    %1397 = vmatpush1.bf16.msra.mxu0 %v928
    %1398 = vmatprep.subr.bf16.mxu0 0
    %1399 = vmatpush1.bf16.msra.mxu0 %v931
    %1400 = vmatprep.mubr.bf16.mxu0 %v76
    %1401 = vmatmul.mubr.bf16.gmra.mrb[0].mxu0 %v75
    %v1402 = vpop.f32.mrb[0].mxu0
    %v1403 = vadd.f32 %v1363, %v1402
    %v1404 = vpop.f32.mrb[0].mxu0
    %v1405 = vpop.f32.mrb[0].mxu0
    %v1406 = vpop.f32.mrb[0].mxu0
    %1407 = vdwg.mxu0
    %1408 = vmatprep.subr.bf16.mxu0 0
    %1409 = vmatpush1.bf16.msra.mxu0 %v934
    %1410 = vmatprep.subr.bf16.mxu0 0
    %1411 = vmatpush1.bf16.msra.mxu0 %v937
    %1412 = vmatprep.subr.bf16.mxu0 0
    %1413 = vmatpush1.bf16.msra.mxu0 %v940
    %1414 = vmatprep.subr.bf16.mxu0 0
    %1415 = vmatpush1.bf16.msra.mxu0 %v943
    %1416 = vmatprep.subr.bf16.mxu0 0
    %1417 = vmatpush1.bf16.msra.mxu0 %v946
    %1418 = vmatprep.subr.bf16.mxu0 0
    %1419 = vmatpush1.bf16.msra.mxu0 %v949
    %1420 = vmatprep.subr.bf16.mxu0 0
    %1421 = vmatpush1.bf16.msra.mxu0 %v952
    %1422 = vmatprep.subr.bf16.mxu0 0
    %1423 = vmatpush1.bf16.msra.mxu0 %v955
    %1424 = vmatprep.subr.bf16.mxu0 0
    %1425 = vmatpush1.bf16.msra.mxu0 %v958
    %1426 = vmatprep.subr.bf16.mxu0 0
    %1427 = vmatpush1.bf16.msra.mxu0 %v961
    %1428 = vmatprep.subr.bf16.mxu0 0
    %1429 = vmatpush1.bf16.msra.mxu0 %v964
    %1430 = vmatprep.subr.bf16.mxu0 0
    %1431 = vmatpush1.bf16.msra.mxu0 %v967
    %1432 = vmatprep.subr.bf16.mxu0 0
    %1433 = vmatpush1.bf16.msra.mxu0 %v970
    %1434 = vmatprep.subr.bf16.mxu0 0
    %1435 = vmatpush1.bf16.msra.mxu0 %v973
    %1436 = vmatprep.subr.bf16.mxu0 0
    %1437 = vmatpush1.bf16.msra.mxu0 %v976
    %1438 = vmatprep.subr.bf16.mxu0 0
    %1439 = vmatpush1.bf16.msra.mxu0 %v979
    %1440 = vmatprep.mubr.bf16.mxu0 %v78
    %1441 = vmatmul.mubr.bf16.gmra.mrb[0].mxu0 %v77
    %v1442 = vpop.f32.mrb[0].mxu0
    %v1443 = vadd.f32 %v1403, %v1442
    %v1444 = vpop.f32.mrb[0].mxu0
    %v1445 = vpop.f32.mrb[0].mxu0
    %v1446 = vpop.f32.mrb[0].mxu0
    %1447 = vdwg.mxu0
    %1448 = vmatprep.subr.bf16.mxu0 0
    %1449 = vmatpush1.bf16.msra.mxu0 %v982
    %1450 = vmatprep.subr.bf16.mxu0 0
    %1451 = vmatpush1.bf16.msra.mxu0 %v985
    %1452 = vmatprep.subr.bf16.mxu0 0
    %1453 = vmatpush1.bf16.msra.mxu0 %v988
    %1454 = vmatprep.subr.bf16.mxu0 0
    %1455 = vmatpush1.bf16.msra.mxu0 %v991
    %1456 = vmatprep.subr.bf16.mxu0 0
    %1457 = vmatpush1.bf16.msra.mxu0 %v994
    %1458 = vmatprep.subr.bf16.mxu0 0
    %1459 = vmatpush1.bf16.msra.mxu0 %v997
    %1460 = vmatprep.subr.bf16.mxu0 0
    %1461 = vmatpush1.bf16.msra.mxu0 0
    %1462 = vmatprep.subr.bf16.mxu0 0
    %1463 = vmatpush1.bf16.msra.mxu0 0
    %1464 = vmatprep.subr.bf16.mxu0 0
    %1465 = vmatpush1.bf16.msra.mxu0 0
    %1466 = vmatprep.subr.bf16.mxu0 0
    %1467 = vmatpush1.bf16.msra.mxu0 0
    %1468 = vmatprep.subr.bf16.mxu0 0
    %1469 = vmatpush1.bf16.msra.mxu0 0
    %1470 = vmatprep.subr.bf16.mxu0 0
    %1471 = vmatpush1.bf16.msra.mxu0 0
    %1472 = vmatprep.subr.bf16.mxu0 0
    %1473 = vmatpush1.bf16.msra.mxu0 0
    %1474 = vmatprep.subr.bf16.mxu0 0
    %1475 = vmatpush1.bf16.msra.mxu0 0
    %1476 = vmatprep.subr.bf16.mxu0 0
    %1477 = vmatpush1.bf16.msra.mxu0 0
    %1478 = vmatprep.subr.bf16.mxu0 0
    %1479 = vmatpush1.bf16.msra.mxu0 0
    %1480 = vmatprep.mubr.bf16.mxu0 0
    %1481 = vmatmul.mubr.bf16.gmra.mrb[0].mxu0 %v1162
    %v1482 = vpop.f32.mrb[0].mxu0
    %v1483 = vadd.f32 %v1443, %v1482
    %v1484 = vpop.f32.mrb[0].mxu0
    %v1485 = vpop.f32.mrb[0].mxu0
    %v1486 = vpop.f32.mrb[0].mxu0
    %1487 = vdwg.mxu0
    %v1488 = vld [vmem:[%s2] sm:$0x1]
    %v1490 = vlaneseq
    %v1491 = vshrl.u32 %v1490, 7
    %v1492 = vsub.s32 0, %v1491
    %v1493 = vrot.slane %v1488, %v1492
    %v1495 = vadd.f32 %v1483, %v1493
    %v1496 = vrot.slane %v1322, 4
    %v1497 = vadd.f32 %v1322, %v1496
    %v1498 = vrot.slane %v1497, 2
    %v1499 = vadd.f32 %v1497, %v1498
    %v1500 = vrot.slane %v1499, 1
    %v1501 = vadd.f32 %v1499, %v1500
    %v1502 = vrot.slane %v1324, 4
    %v1503 = vadd.f32 %v1324, %v1502
    %v1504 = vrot.slane %v1503, 2
    %v1505 = vadd.f32 %v1503, %v1504
    %v1506 = vrot.slane %v1505, 1
    %v1507 = vadd.f32 %v1505, %v1506
    %v1508 = vrcp.pop 8.0
    %v1509 = vmul.f32 %v1501, %v1508
    %v1510 = vmul.f32 %v1507, %v1508
    %v1511 = vsub.f32 %v1322, %v1509
    %v1512 = vsub.f32 %v1324, %v1510
    %v1513 = vmul.f32 %v1511, %v1511
    %v1514 = vmul.f32 %v1512, %v1512
    %v1515 = vrot.slane %v1513, 4
    %v1516 = vadd.f32 %v1513, %v1515
    %v1517 = vrot.slane %v1516, 2
    %v1518 = vadd.f32 %v1516, %v1517
    %v1519 = vrot.slane %v1518, 1
    %v1520 = vadd.f32 %v1518, %v1519
    %v1521 = vrot.slane %v1514, 4
    %v1522 = vadd.f32 %v1514, %v1521
    %v1523 = vrot.slane %v1522, 2
    %v1524 = vadd.f32 %v1522, %v1523
    %v1525 = vrot.slane %v1524, 1
    %v1526 = vadd.f32 %v1524, %v1525
    %v1527 = vmul.f32 %v1520, %v1508
    %v1528 = vmul.f32 %v1526, %v1508
    %v1529 = vld [vmem:[%s3] sm:$0x3]
    %v1530 = vadd.f32 %v1527, 1e-05
    %v1531 = vadd.f32 %v1528, 1e-05
    %v1532 = vrsqrt.pop %v1530
    %v1533 = vrsqrt.pop %v1531
    %v1536 = vcombine.low %v1532, %v1533
    %v1538 = vunpack.c.l.s4 1966171168
    %v1539 = vunpack.c.0.s8 %v1538
    %v1540 = vlaneseq
    %v1541 = vshrl.u32 %v1540, 7
    %v1542 = vsub.s32 %v1539, %v1541
    %v1543 = vrot.slane %v1536, %v1542
    %v1545 = vunpack.c.l.s4 1966171168
    %v1546 = vunpack.c.0.s8 %v1545
    %v1547 = vlaneseq
    %v1548 = vshrl.u32 %v1547, 7
    %v1549 = vsub.s32 %v1546, %v1548
    %v1550 = vrot.slane %v1543, %v1549
    %v1552 = vmul.f32 %v1529, %v1550
    %v1554 = vlaneseq
    %v1555 = vshrl.u32 %v1554, 7
    %v1556 = vsub.s32 0, %v1555
    %v1557 = vrot.slane %v1552, %v1556
    %v1558 = vlaneseq
    %v1559 = vshrl.u32 %v1558, 7
    %v1560 = vsub.s32 1, %v1559
    %v1561 = vrot.slane %v1552, %v1560
    %v1564 = vmul.f32 %v1511, %v1557
    %v1565 = vmul.f32 %v1512, %v1561
    %v1566 = vld [vmem:[%s4] sm:$0x3]
    %v1568 = vlaneseq
    %v1569 = vshrl.u32 %v1568, 7
    %v1570 = vsub.s32 0, %v1569
    %v1571 = vrot.slane %v1566, %v1570
    %v1572 = vlaneseq
    %v1573 = vshrl.u32 %v1572, 7
    %v1574 = vsub.s32 1, %v1573
    %v1575 = vrot.slane %v1566, %v1574
    %v1578 = vadd.f32 %v1564, %v1571
    %v1579 = vadd.f32 %v1565, %v1575
    %v1580 = vmax.f32 %v1578, 0.0
    %v1581 = vmax.f32 %v1579, 0.0
    %v1582 = vpack.c.bf16 %v1580, %v1580
    %v1583 = vpack.c.bf16 %v1581, %v1581
    %v1584 = vld [vmem:[#allocation6] sm:$0xf]
    %v1585 = vld [vmem:[#allocation6 + $0x4] sm:$0xf]
    %v1586 = vld [vmem:[#allocation6 + $0x8] sm:$0xf]
    %v1587 = vld [vmem:[#allocation6 + $0xc] sm:$0xf]
    %v1588 = vld [vmem:[#allocation6 + $0x10] sm:$0xf]
    %v1589 = vld [vmem:[#allocation6 + $0x14] sm:$0xf]
    %v1590 = vld [vmem:[#allocation6 + $0x18] sm:$0xf]
    %v1591 = vld [vmem:[#allocation6 + $0x1c] sm:$0xf]
    %v1592 = vld [vmem:[#allocation6 + $0x20] sm:$0xf]
    %v1593 = vld [vmem:[#allocation6 + $0x24] sm:$0xf]
    %v1594 = vld [vmem:[#allocation6 + $0x28] sm:$0xf]
    %v1595 = vld [vmem:[#allocation6 + $0x2c] sm:$0xf]
    %v1596 = vld [vmem:[#allocation6 + $0x30] sm:$0xf]
    %v1597 = vld [vmem:[#allocation6 + $0x34] sm:$0xf]
    %v1598 = vld [vmem:[#allocation6 + $0x38] sm:$0xf]
    %v1599 = vld [vmem:[#allocation6 + $0x3c] sm:$0xf]
    %v1600 = vld [vmem:[#allocation6 + $0x40] sm:$0xf]
    %v1601 = vld [vmem:[#allocation6 + $0x44] sm:$0xf]
    %v1602 = vld [vmem:[#allocation6 + $0x48] sm:$0xf]
    %v1603 = vld [vmem:[#allocation6 + $0x4c] sm:$0xf]
    %v1604 = vld [vmem:[#allocation6 + $0x50] sm:$0xf]
    %v1605 = vld [vmem:[#allocation6 + $0x54] sm:$0xf]
    %v1606 = vld [vmem:[#allocation6 + $0x58] sm:$0xf]
    %v1607 = vld [vmem:[#allocation6 + $0x5c] sm:$0xf]
    %v1608 = vld [vmem:[#allocation6 + $0x60] sm:$0xf]
    %v1609 = vld [vmem:[#allocation6 + $0x64] sm:$0xf]
    %v1610 = vld [vmem:[#allocation6 + $0x68] sm:$0xf]
    %v1611 = vld [vmem:[#allocation6 + $0x6c] sm:$0xf]
    %v1612 = vld [vmem:[#allocation6 + $0x70] sm:$0xf]
    %v1613 = vld [vmem:[#allocation6 + $0x74] sm:$0xf]
    %v1614 = vld [vmem:[#allocation6 + $0x78] sm:$0xf]
    %v1615 = vld [vmem:[#allocation6 + $0x7c] sm:$0xf]
    %v1616 = vld [vmem:[%s6] sm:$0x1]
    %v1618 = vlaneseq
    %v1619 = vshrl.u32 %v1618, 7
    %v1620 = vsub.s32 0, %v1619
    %v1621 = vrot.slane %v1616, %v1620
    %v1655 = vunpack.c.l.b16 %v1584
    %v1656 = vunpack.c.l.b16 %v1585
    %v1657 = vunpack.c.l.b16 %v1586
    %v1658 = vunpack.c.l.b16 %v1587
    %v1659 = vunpack.c.l.b16 %v1588
    %v1660 = vunpack.c.l.b16 %v1589
    %v1661 = vunpack.c.l.b16 %v1590
    %v1662 = vunpack.c.l.b16 %v1591
    %v1663 = vunpack.c.l.b16 %v1592
    %v1664 = vunpack.c.l.b16 %v1593
    %v1665 = vunpack.c.l.b16 %v1594
    %v1666 = vunpack.c.l.b16 %v1595
    %v1667 = vunpack.c.l.b16 %v1596
    %v1668 = vunpack.c.l.b16 %v1597
    %v1669 = vunpack.c.l.b16 %v1598
    %v1670 = vunpack.c.l.b16 %v1599
    %v1671 = vunpack.c.l.b16 %v1600
    %v1672 = vunpack.c.l.b16 %v1601
    %v1673 = vunpack.c.l.b16 %v1602
    %v1674 = vunpack.c.l.b16 %v1603
    %v1675 = vunpack.c.l.b16 %v1604
    %v1676 = vunpack.c.l.b16 %v1605
    %v1677 = vunpack.c.l.b16 %v1606
    %v1678 = vunpack.c.l.b16 %v1607
    %v1679 = vunpack.c.l.b16 %v1608
    %v1680 = vunpack.c.l.b16 %v1609
    %v1681 = vunpack.c.l.b16 %v1610
    %v1682 = vunpack.c.l.b16 %v1611
    %v1683 = vunpack.c.l.b16 %v1612
    %v1684 = vunpack.c.l.b16 %v1613
    %v1685 = vunpack.c.l.b16 %v1614
    %v1686 = vunpack.c.l.b16 %v1615
    %v1687 = vpack.c.b16 %v1656, %v1655
    %v1688 = vpack.c.b16 %v1658, %v1657
    %v1689 = vpack.c.b16 %v1660, %v1659
    %v1690 = vpack.c.b16 %v1662, %v1661
    %v1691 = vpack.c.b16 %v1664, %v1663
    %v1692 = vpack.c.b16 %v1666, %v1665
    %v1693 = vpack.c.b16 %v1668, %v1667
    %v1694 = vpack.c.b16 %v1670, %v1669
    %v1695 = vpack.c.b16 %v1672, %v1671
    %v1696 = vpack.c.b16 %v1674, %v1673
    %v1697 = vpack.c.b16 %v1676, %v1675
    %v1698 = vpack.c.b16 %v1678, %v1677
    %v1699 = vpack.c.b16 %v1680, %v1679
    %v1700 = vpack.c.b16 %v1682, %v1681
    %v1701 = vpack.c.b16 %v1684, %v1683
    %v1702 = vpack.c.b16 %v1686, %v1685
    %1719 = vmatprep.subr.bf16.mxu0 0
    %1720 = vmatpush1.bf16.msra.mxu0 %v1687
    %1721 = vmatprep.subr.bf16.mxu0 0
    %1722 = vmatpush1.bf16.msra.mxu0 %v1688
    %1723 = vmatprep.subr.bf16.mxu0 0
    %1724 = vmatpush1.bf16.msra.mxu0 %v1689
    %1725 = vmatprep.subr.bf16.mxu0 0
    %1726 = vmatpush1.bf16.msra.mxu0 %v1690
    %1727 = vmatprep.subr.bf16.mxu0 0
    %1728 = vmatpush1.bf16.msra.mxu0 %v1691
    %1729 = vmatprep.subr.bf16.mxu0 0
    %1730 = vmatpush1.bf16.msra.mxu0 %v1692
    %1731 = vmatprep.subr.bf16.mxu0 0
    %1732 = vmatpush1.bf16.msra.mxu0 %v1693
    %1733 = vmatprep.subr.bf16.mxu0 0
    %1734 = vmatpush1.bf16.msra.mxu0 %v1694
    %1735 = vmatprep.subr.bf16.mxu0 0
    %1736 = vmatpush1.bf16.msra.mxu0 %v1695
    %1737 = vmatprep.subr.bf16.mxu0 0
    %1738 = vmatpush1.bf16.msra.mxu0 %v1696
    %1739 = vmatprep.subr.bf16.mxu0 0
    %1740 = vmatpush1.bf16.msra.mxu0 %v1697
    %1741 = vmatprep.subr.bf16.mxu0 0
    %1742 = vmatpush1.bf16.msra.mxu0 %v1698
    %1743 = vmatprep.subr.bf16.mxu0 0
    %1744 = vmatpush1.bf16.msra.mxu0 %v1699
    %1745 = vmatprep.subr.bf16.mxu0 0
    %1746 = vmatpush1.bf16.msra.mxu0 %v1700
    %1747 = vmatprep.subr.bf16.mxu0 0
    %1748 = vmatpush1.bf16.msra.mxu0 %v1701
    %1749 = vmatprep.subr.bf16.mxu0 0
    %1750 = vmatpush1.bf16.msra.mxu0 %v1702
    %1751 = vmatprep.mubr.bf16.mxu0 %v1583
    %1752 = vmatmul.mubr.bf16.gmra.mrb[0].mxu0 %v1582
    %v1753 = vpop.f32.mrb[0].mxu0
    %v1754 = vadd.f32 %v1621, %v1753
    %v1755 = vpop.f32.mrb[0].mxu0
    %v1756 = vpop.f32.mrb[0].mxu0
    %v1757 = vpop.f32.mrb[0].mxu0
    %1758 = vdwg.mxu0
    %1759 = vst [vmem:[%s7] sm:$0xff] %v1754
    %1760 = vst [vmem:[%s7 + $0x8] sm:$0xff] %v1495
    // Predicated region
    $region42: #{dann_head.1} parent=1 // pred_check
      _
    $region43: #{dann_head.1} parent=1 // pred_check_branch
      %1762 = sbr.rel (0) target = $region45
    $region44: #{dann_head.1} parent=1 // pred_region
      _
    $region45: #{dann_head.1} parent=1 // pred_fallthru
      _
    // Predicated region
    $region46: #{dann_head.1} parent=1 // pred_check
      _
    $region47: #{dann_head.1} parent=1 // pred_check_branch
      %1764 = sbr.rel (0) target = $region49
    $region48: #{dann_head.1} parent=1 // pred_region
      _
    $region49: #{dann_head.1} parent=1 // pred_fallthru
      _
    %1765 = vsyncpa [#allocation3], 1
    %1766 = vsyncpa [#allocation5], 1

</llo_original>
